<compile_context>
chip_gen: v7x
topology: tpu7x:2x2x1
jax: 0.10.0
libtpu: 0.0.40
codegen_flags: <defaults>
</compile_context>

<pallas_src>
import jax
import jax.numpy as jnp
from jax.experimental import pallas as pl
from jax.experimental.pallas import tpu as pltpu


# -----------------------------------------------------------------------------
# Shared math (used inside the Pallas kernel and by the pure-JAX reference).
# `recip` is pl.reciprocal(approx=True) in-kernel and exact 1/x in the reference.
# -----------------------------------------------------------------------------
def _softmax(z, axis, recip):
    m = jnp.max(z, axis=axis, keepdims=True)
    e = jnp.exp(z - m)
    return e * recip(jnp.sum(e, axis=axis, keepdims=True))


def _forward_single(p, wbb, wh_bf, wdf_bf, whp_bf, wvec, ct, recip):
    """One point cloud: p [N, 3] f32 -> score row [1, N] f32 (raw logits)."""
    f32, bf16 = jnp.float32, jnp.bfloat16

    # packed row-vector / scalar parameters
    bbb = wvec[0:1, :]            # [1, D]  backbone bias
    bh = wvec[1:2, :]             # [1, D]  voting hidden bias
    bdf = wvec[2:3, :]            # [1, D]  delta_f bias
    wsg = wvec[3:4, :]            # [1, D]  score weight on g
    wsh = wvec[4:5, :]            # [1, D]  score weight on attended cluster feat
    wrho = wvec[5:6, :]           # [1, D]  rho projection (row orientation)
    bhp = wvec[6:7, 0:8]          # [1, 8]  [bdx0, bdx1, bdx2, b_rho, 0, ...]
    brho = wvec[6:7, 3:4]         # [1, 1]
    w_rho_s = wvec[7:8, 0:1]      # [1, 1]  score weight on rho
    w_mind_s = wvec[7:8, 1:2]     # [1, 1]  score weight on min cluster distance
    s_bias = wvec[7:8, 2:3]       # [1, 1]
    inv_temp = wvec[7:8, 3:4]     # [1, 1]  1 / clustering temperature

    # --- PointMAEBackbone: per-point embedding (MXU matmul, K=3) ---
    g = jax.nn.gelu(jnp.dot(p, wbb, preferred_element_type=f32) + bbb,
                    approximate=True)                                    # [N, D]
    g_bf = g.astype(bf16)

    # --- VotingHead: shared hidden layer + fused heads (bf16 MXU, f32 acc) ---
    h = jnp.maximum(jnp.dot(g_bf, wh_bf, preferred_element_type=f32) + bh, 0.0)
    h_bf = h.astype(bf16)
    delta_f = jnp.dot(h_bf, wdf_bf, preferred_element_type=f32) + bdf    # [N, D]
    # fused rank-1 heads: cols 0-2 = delta_x, col 3 = rho  (beta head dropped:
    # the reference computes beta but never uses it downstream)
    proj = jnp.dot(h_bf, whp_bf, preferred_element_type=f32) + bhp       # [N, 8]
    dx = proj[:, 0:3]                                                    # [N, 3]
    rho = proj[:, 3:4]                                                   # [N, 1]

    # votes = [p + delta_x, rho]
    v = p + dx                                                           # [N, 3]

    # --- DifferentiableClustering: soft assignment to K learnable seeds ---
    # d2[n,k] = ||v_n - ct_xyz_k||^2 + (rho_n - ct_rho_k)^2   (expanded form,
    # cross term on the MXU)
    cross = (jnp.dot(v, ct[0:3, :], preferred_element_type=f32)
             + rho * ct[3:4, :])                                         # [N, K]
    v_sq = jnp.sum(v * v, axis=-1, keepdims=True) + rho * rho            # [N, 1]
    ct_sq = jnp.sum(ct * ct, axis=0, keepdims=True)                      # [1, K]
    d2 = v_sq - 2.0 * cross + ct_sq                                      # [N, K]

    alpha = _softmax(-d2 * inv_temp, -1, recip)                          # [N, K]
    wsum = jnp.sum(alpha, axis=0, keepdims=True)                         # [1, K]
    alpha_n = alpha * recip(wsum + 1e-6)                                 # [N, K]

    # cluster position centroids and feature centroids (both on the MXU)
    mu = jax.lax.dot_general(alpha_n, v, (((0,), (0,)), ((), ())),
                             preferred_element_type=f32)                 # [K, 3]
    h_k = jax.lax.dot_general(alpha_n.astype(bf16), delta_f.astype(bf16),
                              (((0,), (0,)), ((), ())),
                              preferred_element_type=f32)                # [K, D]

    # --- PointScoringHead, computed in transposed ([K,N]/[1,N]) orientation so
    #     the final score is a lane-dense [1, N] row (dense vector stores). ---
    ones3 = jnp.ones((1, 3), f32)
    p_sq_row = jax.lax.dot_general(ones3, p * p, (((1,), (1,)), ((), ())),
                                   preferred_element_type=f32)           # [1, N]
    cross_t = jax.lax.dot_general(mu, p, (((1,), (1,)), ((), ())),
                                  preferred_element_type=f32)            # [K, N]
    mu_sq = jnp.sum(mu * mu, axis=-1, keepdims=True)                     # [K, 1]
    d2s_t = p_sq_row - 2.0 * cross_t + mu_sq                             # [K, N]

    min_dist = jnp.sqrt(
        jnp.maximum(jnp.min(d2s_t, axis=0, keepdims=True), 0.0) + 1e-12)  # [1, N]
    w_att_t = _softmax(-d2s_t, 0, recip)                                 # [K, N]

    # h_att . wsh  ==  w_att @ (h_k . wsh)  (re-associated; skips [N,D] h_att)
    s_k = jax.lax.dot_general(wsh.astype(bf16), h_k.astype(bf16),
                              (((1,), (1,)), ((), ())),
                              preferred_element_type=f32)                # [1, K]
    sh_row = jnp.dot(s_k, w_att_t, preferred_element_type=f32)           # [1, N]
    sg_row = jax.lax.dot_general(wsg.astype(bf16), g_bf,
                                 (((1,), (1,)), ((), ())),
                                 preferred_element_type=f32)             # [1, N]
    rho_row = jax.lax.dot_general(wrho.astype(bf16), h_bf,
                                  (((1,), (1,)), ((), ())),
                                  preferred_element_type=f32) + brho     # [1, N]

    score = (sg_row + sh_row + rho_row * w_rho_s
             + min_dist * w_mind_s + s_bias)                             # [1, N]
    return score


# -----------------------------------------------------------------------------
# Pallas kernel: one batch element per grid step
# -----------------------------------------------------------------------------
def _vote_ad_kernel(pc_ref, wbb_ref, wh_ref, wdf_ref, whp_ref, wvec_ref, ct_ref,
                    scores_ref):
    p = pc_ref[0]                                                        # [N, 3]
    score_row = _forward_single(
        p, wbb_ref[...], wh_ref[...], wdf_ref[...], whp_ref[...],
        wvec_ref[...], ct_ref[...],
        recip=lambda x: pl.reciprocal(x, approx=True))
    scores_ref[0] = score_row                                            # [1, N]
    # TODO(synk): module state `self.last_predicted_offsets` (delta_x) and the
    # unused VariedDefectSynthesis sub-module have no Pallas-output equivalent.
    # TODO(synk): for realistic N (>> 128), tile N in the grid and turn the
    # clustering sums (wsum, mu, h_k) into a two-pass accumulator reduction.


def vote_ad_forward(point_cloud, packed):
    """point_cloud: [B, N, 3] f32 -> (scores [B, N], obj_scores [B])."""
    B, N, _ = point_cloud.shape
    weights = list(packed)

    in_specs = ([pl.BlockSpec((1, N, 3), lambda b: (b, 0, 0))]
                + [pl.BlockSpec(w.shape, lambda b: (0, 0)) for w in weights])
    out_specs = pl.BlockSpec((1, 1, N), lambda b: (b, 0, 0))   # lane-dense rows
    out_shape = jax.ShapeDtypeStruct((B, 1, N), jnp.float32)

    rows = pl.pallas_call(
        _vote_ad_kernel,
        grid=(B,),
        in_specs=in_specs,
        out_specs=out_specs,
        out_shape=out_shape,
        compiler_params=pltpu.CompilerParams(
            dimension_semantics=("parallel",)),
    )(point_cloud, *weights)

    scores = rows[:, 0, :]                                               # [B, N]
    # sigmoid is monotone, so max(sigmoid(s)) == sigmoid(max(s)); do it in XLA.
    obj_scores = jax.nn.sigmoid(jnp.max(scores, axis=-1))                # [B]
    return scores, obj_scores


# -----------------------------------------------------------------------------
# Pure-JAX reference (same math, vmapped) for a sanity check
# -----------------------------------------------------------------------------
def vote_ad_reference(point_cloud, packed):
    f = lambda p: _forward_single(p, *packed, recip=lambda x: 1.0 / x)
    rows = jax.vmap(f)(point_cloud)                                      # [B,1,N]
    scores = rows[:, 0, :]
    obj_scores = jax.nn.sigmoid(jnp.max(scores, axis=-1))
    return scores, obj_scores


# -----------------------------------------------------------------------------
# Deterministic parameter init (synthetic; no checkpoint loading) + packing
# -----------------------------------------------------------------------------
def init_params(key, feat_dim=128, num_clusters=8):
    D, K = feat_dim, num_clusters
    ks = jax.random.split(key, 8)

    def nrm(k, shape, fan):
        return (jax.random.normal(k, shape, jnp.float32) /
                jnp.sqrt(jnp.float32(fan)))

    return dict(
        wbb=nrm(ks[0], (3, D), 3),          bbb=jnp.zeros((1, D), jnp.float32),
        wh=nrm(ks[1], (D, D), D),           bh=jnp.zeros((1, D), jnp.float32),
        wdf=nrm(ks[2], (D, D), D),          bdf=jnp.zeros((1, D), jnp.float32),
        wdx=nrm(ks[3], (3, D), D) * 0.1,    bdx=jnp.zeros((1, 3), jnp.float32),
        wrb=nrm(ks[4], (2, D), D),          brb=jnp.zeros((1, 2), jnp.float32),
        ct=nrm(ks[5], (4, K), 1),
        wsg=nrm(ks[6], (1, D), D),
        wsh=nrm(ks[7], (1, D), D),
        # [w_rho, w_min_dist, score_bias, clustering_temperature]
        wsm=jnp.array([[0.5, -0.7, 0.1, 0.5]], jnp.float32),
    )


def pack_params(params):
    """Consolidate the 14 raw parameter arrays into 6 kernel inputs."""
    D = params["wh"].shape[0]
    wdx, bdx = params["wdx"], params["bdx"]
    wrb, brb = params["wrb"], params["brb"]
    wsm = params["wsm"]

    # fused rank-1 voting heads: cols 0-2 = delta_x, col 3 = rho (beta dropped)
    whp = jnp.zeros((D, 8), jnp.float32)
    whp = whp.at[:, 0:3].set(wdx.T)
    whp = whp.at[:, 3].set(wrb[0])

    # packed row vectors / scalars (rows mapped to lanes; see _forward_single)
    wvec = jnp.zeros((8, D), jnp.float32)
    wvec = wvec.at[0].set(params["bbb"][0])
    wvec = wvec.at[1].set(params["bh"][0])
    wvec = wvec.at[2].set(params["bdf"][0])
    wvec = wvec.at[3].set(params["wsg"][0])
    wvec = wvec.at[4].set(params["wsh"][0])
    wvec = wvec.at[5].set(wrb[0])                 # rho projection, row form
    wvec = wvec.at[6, 0:3].set(bdx[0])
    wvec = wvec.at[6, 3].set(brb[0, 0])
    wvec = wvec.at[7, 0].set(wsm[0, 0])
    wvec = wvec.at[7, 1].set(wsm[0, 1])
    wvec = wvec.at[7, 2].set(wsm[0, 2])
    wvec = wvec.at[7, 3].set(1.0 / wsm[0, 3])     # precomputed 1/temperature

    return (params["wbb"],
            params["wh"].astype(jnp.bfloat16),    # bf16 MXU operands
            params["wdf"].astype(jnp.bfloat16),
            whp.astype(jnp.bfloat16),
            wvec,
            params["ct"])


if __name__ == "__main__":
    B, N = 2, 128           # batch, points per cloud
    FEAT_DIM, NUM_CLUSTERS = 128, 8

    key = jax.random.PRNGKey(0)
    k_pc, k_par = jax.random.split(key)
    point_cloud = jax.random.normal(k_pc, (B, N, 3), jnp.float32)
    params = init_params(k_par, FEAT_DIM, NUM_CLUSTERS)
    packed = pack_params(params)

    scores, obj_scores = vote_ad_forward(point_cloud, packed)
    jax.block_until_ready((scores, obj_scores))

    assert scores.shape == (B, N) and obj_scores.shape == (B,)
    assert bool(jnp.all(jnp.isfinite(scores))) and bool(
        jnp.all(jnp.isfinite(obj_scores)))

    ref_scores, ref_obj = vote_ad_reference(point_cloud, packed)
    assert jnp.allclose(scores, ref_scores, atol=2e-2, rtol=2e-2)
    assert jnp.allclose(obj_scores, ref_obj, atol=2e-2, rtol=2e-2)

    print("KERNEL_OK")
</pallas_src>

<mosaic_0001>
module attributes {stable_mosaic.version = 11 : i64} {
  func.func @_vote_ad_kernel(%arg0: i32, %arg1: memref<1x128x3xf32, #tpu.memory_space<vmem>>, %arg2: memref<3x128xf32, #tpu.memory_space<vmem>>, %arg3: memref<128x128xbf16, #tpu.memory_space<vmem>>, %arg4: memref<128x128xbf16, #tpu.memory_space<vmem>>, %arg5: memref<128x8xbf16, #tpu.memory_space<vmem>>, %arg6: memref<8x128xf32, #tpu.memory_space<vmem>>, %arg7: memref<4x8xf32, #tpu.memory_space<vmem>>, %arg8: memref<1x1x128xf32, #tpu.memory_space<vmem>>) attributes {dimension_semantics = [#tpu.dimension_semantics<parallel>], iteration_bounds = array<i64: 2>, scalar_prefetch = 0 : i64, scratch_operands = 0 : i64, tpu.core_type = #tpu.core_type<tc>, window_params = [{transform_indices = @transform_0, window_bounds = array<i64: 1, 128, 3>}, {pipeline_mode = #tpu.pipeline_mode<synchronous>, transform_indices = @transform_1, window_bounds = array<i64: 3, 128>}, {pipeline_mode = #tpu.pipeline_mode<synchronous>, transform_indices = @transform_2, window_bounds = array<i64: 128, 128>}, {pipeline_mode = #tpu.pipeline_mode<synchronous>, transform_indices = @transform_3, window_bounds = array<i64: 128, 128>}, {pipeline_mode = #tpu.pipeline_mode<synchronous>, transform_indices = @transform_4, window_bounds = array<i64: 128, 8>}, {pipeline_mode = #tpu.pipeline_mode<synchronous>, transform_indices = @transform_5, window_bounds = array<i64: 8, 128>}, {pipeline_mode = #tpu.pipeline_mode<synchronous>, transform_indices = @transform_6, window_bounds = array<i64: 4, 8>}, {transform_indices = @transform_7, window_bounds = array<i64: 1, 1, 128>}]} {
    %c0 = arith.constant 0 : index
    %c0_0 = arith.constant 0 : index
    %c0_1 = arith.constant 0 : index
    %0 = vector.load %arg1[%c0, %c0_0, %c0_1] : memref<1x128x3xf32, #tpu.memory_space<vmem>>, vector<1x128x3xf32>
    %1 = vector.shape_cast %0 : vector<1x128x3xf32> to vector<128x3xf32>
    %c0_2 = arith.constant 0 : index
    %c0_3 = arith.constant 0 : index
    %2 = vector.load %arg2[%c0_2, %c0_3] : memref<3x128xf32, #tpu.memory_space<vmem>>, vector<3x128xf32>
    %c0_4 = arith.constant 0 : index
    %c0_5 = arith.constant 0 : index
    %3 = vector.load %arg3[%c0_4, %c0_5] : memref<128x128xbf16, #tpu.memory_space<vmem>>, vector<128x128xbf16>
    %c0_6 = arith.constant 0 : index
    %c0_7 = arith.constant 0 : index
    %4 = vector.load %arg4[%c0_6, %c0_7] : memref<128x128xbf16, #tpu.memory_space<vmem>>, vector<128x128xbf16>
    %c0_8 = arith.constant 0 : index
    %c0_9 = arith.constant 0 : index
    %5 = vector.load %arg5[%c0_8, %c0_9] : memref<128x8xbf16, #tpu.memory_space<vmem>>, vector<128x8xbf16>
    %c0_10 = arith.constant 0 : index
    %c0_11 = arith.constant 0 : index
    %6 = vector.load %arg6[%c0_10, %c0_11] : memref<8x128xf32, #tpu.memory_space<vmem>>, vector<8x128xf32>
    %c0_12 = arith.constant 0 : index
    %c0_13 = arith.constant 0 : index
    %7 = vector.load %arg7[%c0_12, %c0_13] : memref<4x8xf32, #tpu.memory_space<vmem>>, vector<4x8xf32>
    %8 = vector.extract_strided_slice %6 {offsets = [0, 0], sizes = [1, 128], strides = [1, 1]} : vector<8x128xf32> to vector<1x128xf32>
    %9 = vector.extract_strided_slice %6 {offsets = [1, 0], sizes = [1, 128], strides = [1, 1]} : vector<8x128xf32> to vector<1x128xf32>
    %10 = vector.extract_strided_slice %6 {offsets = [2, 0], sizes = [1, 128], strides = [1, 1]} : vector<8x128xf32> to vector<1x128xf32>
    %11 = vector.extract_strided_slice %6 {offsets = [3, 0], sizes = [1, 128], strides = [1, 1]} : vector<8x128xf32> to vector<1x128xf32>
    %12 = vector.extract_strided_slice %6 {offsets = [4, 0], sizes = [1, 128], strides = [1, 1]} : vector<8x128xf32> to vector<1x128xf32>
    %13 = vector.extract_strided_slice %6 {offsets = [5, 0], sizes = [1, 128], strides = [1, 1]} : vector<8x128xf32> to vector<1x128xf32>
    %14 = vector.extract_strided_slice %6 {offsets = [6, 0], sizes = [1, 8], strides = [1, 1]} : vector<8x128xf32> to vector<1x8xf32>
    %15 = vector.extract_strided_slice %6 {offsets = [6, 3], sizes = [1, 1], strides = [1, 1]} : vector<8x128xf32> to vector<1x1xf32>
    %16 = vector.extract_strided_slice %6 {offsets = [7, 0], sizes = [1, 1], strides = [1, 1]} : vector<8x128xf32> to vector<1x1xf32>
    %17 = vector.extract_strided_slice %6 {offsets = [7, 1], sizes = [1, 1], strides = [1, 1]} : vector<8x128xf32> to vector<1x1xf32>
    %18 = vector.extract_strided_slice %6 {offsets = [7, 2], sizes = [1, 1], strides = [1, 1]} : vector<8x128xf32> to vector<1x1xf32>
    %19 = vector.extract_strided_slice %6 {offsets = [7, 3], sizes = [1, 1], strides = [1, 1]} : vector<8x128xf32> to vector<1x1xf32>
    %cst = arith.constant dense<0.000000e+00> : vector<128x128xf32>
    %20 = tpu.matmul %1, %2, %cst {dimension_numbers = #tpu.dot_dimension_numbers<[1], [0], [0], [1], [0, 0, 1, 1], [], []>} : vector<128x3xf32>, vector<3x128xf32>, vector<128x128xf32> -> vector<128x128xf32>
    %21 = vector.broadcast %8 : vector<1x128xf32> to vector<128x128xf32>
    %22 = arith.addf %20, %21 : vector<128x128xf32>
    %23 = arith.mulf %22, %22 : vector<128x128xf32>
    %24 = arith.mulf %22, %23 : vector<128x128xf32>
    %cst_14 = arith.constant 4.471500e-02 : f32
    %25 = vector.broadcast %cst_14 : f32 to vector<128x128xf32>
    %26 = arith.mulf %25, %24 : vector<128x128xf32>
    %27 = arith.addf %22, %26 : vector<128x128xf32>
    %cst_15 = arith.constant 0.797884583 : f32
    %28 = vector.broadcast %cst_15 : f32 to vector<128x128xf32>
    %29 = arith.mulf %28, %27 : vector<128x128xf32>
    %30 = math.tanh %29 : vector<128x128xf32>
    %cst_16 = arith.constant 1.000000e+00 : f32
    %31 = vector.broadcast %cst_16 : f32 to vector<128x128xf32>
    %32 = arith.addf %31, %30 : vector<128x128xf32>
    %cst_17 = arith.constant 5.000000e-01 : f32
    %33 = vector.broadcast %cst_17 : f32 to vector<128x128xf32>
    %34 = arith.mulf %33, %32 : vector<128x128xf32>
    %35 = arith.mulf %22, %34 : vector<128x128xf32>
    %36 = arith.truncf %35 : vector<128x128xf32> to vector<128x128xbf16>
    %cst_18 = arith.constant dense<0.000000e+00> : vector<128x128xf32>
    %37 = tpu.matmul %36, %3, %cst_18 {dimension_numbers = #tpu.dot_dimension_numbers<[1], [0], [0], [1], [0, 0, 1, 1], [], []>} : vector<128x128xbf16>, vector<128x128xbf16>, vector<128x128xf32> -> vector<128x128xf32>
    %38 = vector.broadcast %9 : vector<1x128xf32> to vector<128x128xf32>
    %39 = arith.addf %37, %38 : vector<128x128xf32>
    %cst_19 = arith.constant 0.000000e+00 : f32
    %40 = vector.broadcast %cst_19 : f32 to vector<128x128xf32>
    %41 = arith.maximumf %39, %40 : vector<128x128xf32>
    %42 = arith.truncf %41 : vector<128x128xf32> to vector<128x128xbf16>
    %cst_20 = arith.constant dense<0.000000e+00> : vector<128x128xf32>
    %43 = tpu.matmul %42, %4, %cst_20 {dimension_numbers = #tpu.dot_dimension_numbers<[1], [0], [0], [1], [0, 0, 1, 1], [], []>} : vector<128x128xbf16>, vector<128x128xbf16>, vector<128x128xf32> -> vector<128x128xf32>
    %44 = vector.broadcast %10 : vector<1x128xf32> to vector<128x128xf32>
    %45 = arith.addf %43, %44 : vector<128x128xf32>
    %cst_21 = arith.constant dense<0.000000e+00> : vector<128x8xf32>
    %46 = tpu.matmul %42, %5, %cst_21 {dimension_numbers = #tpu.dot_dimension_numbers<[1], [0], [0], [1], [0, 0, 1, 1], [], []>} : vector<128x128xbf16>, vector<128x8xbf16>, vector<128x8xf32> -> vector<128x8xf32>
    %47 = vector.broadcast %14 : vector<1x8xf32> to vector<128x8xf32>
    %48 = arith.addf %46, %47 : vector<128x8xf32>
    %49 = vector.extract_strided_slice %48 {offsets = [0, 0], sizes = [128, 3], strides = [1, 1]} : vector<128x8xf32> to vector<128x3xf32>
    %50 = vector.extract_strided_slice %48 {offsets = [0, 3], sizes = [128, 1], strides = [1, 1]} : vector<128x8xf32> to vector<128x1xf32>
    %51 = arith.addf %1, %49 : vector<128x3xf32>
    %52 = vector.extract_strided_slice %7 {offsets = [0, 0], sizes = [3, 8], strides = [1, 1]} : vector<4x8xf32> to vector<3x8xf32>
    %cst_22 = arith.constant dense<0.000000e+00> : vector<128x8xf32>
    %53 = tpu.matmul %51, %52, %cst_22 {dimension_numbers = #tpu.dot_dimension_numbers<[1], [0], [0], [1], [0, 0, 1, 1], [], []>} : vector<128x3xf32>, vector<3x8xf32>, vector<128x8xf32> -> vector<128x8xf32>
    %54 = vector.extract_strided_slice %7 {offsets = [3, 0], sizes = [1, 8], strides = [1, 1]} : vector<4x8xf32> to vector<1x8xf32>
    %55 = vector.broadcast %50 : vector<128x1xf32> to vector<128x8xf32>
    %56 = vector.broadcast %54 : vector<1x8xf32> to vector<128x8xf32>
    %57 = arith.mulf %55, %56 : vector<128x8xf32>
    %58 = arith.addf %53, %57 : vector<128x8xf32>
    %59 = arith.mulf %51, %51 : vector<128x3xf32>
    %cst_23 = arith.constant dense<0.000000e+00> : vector<128xf32>
    %60 = vector.multi_reduction <add>, %59, %cst_23 [1] : vector<128x3xf32> to vector<128xf32>
    %61 = vector.shape_cast %60 : vector<128xf32> to vector<128x1xf32>
    %62 = arith.mulf %50, %50 : vector<128x1xf32>
    %63 = arith.addf %61, %62 : vector<128x1xf32>
    %64 = arith.mulf %7, %7 : vector<4x8xf32>
    %cst_24 = arith.constant dense<0.000000e+00> : vector<8xf32>
    %65 = vector.multi_reduction <add>, %64, %cst_24 [0] : vector<4x8xf32> to vector<8xf32>
    %66 = vector.shape_cast %65 : vector<8xf32> to vector<1x8xf32>
    %cst_25 = arith.constant 2.000000e+00 : f32
    %67 = vector.broadcast %cst_25 : f32 to vector<128x8xf32>
    %68 = arith.mulf %67, %58 : vector<128x8xf32>
    %69 = vector.broadcast %63 : vector<128x1xf32> to vector<128x8xf32>
    %70 = arith.subf %69, %68 : vector<128x8xf32>
    %71 = vector.broadcast %66 : vector<1x8xf32> to vector<128x8xf32>
    %72 = arith.addf %70, %71 : vector<128x8xf32>
    %cst_26 = arith.constant 0.000000e+00 : f32
    %73 = vector.broadcast %cst_26 : f32 to vector<128x8xf32>
    %74 = arith.subf %73, %72 : vector<128x8xf32>
    %75 = vector.broadcast %19 : vector<1x1xf32> to vector<128x8xf32>
    %76 = arith.mulf %74, %75 : vector<128x8xf32>
    %cst_27 = arith.constant dense<0xFF800000> : vector<128xf32>
    %77 = vector.multi_reduction <maximumf>, %76, %cst_27 [1] : vector<128x8xf32> to vector<128xf32>
    %78 = vector.shape_cast %77 : vector<128xf32> to vector<128x1xf32>
    %79 = vector.broadcast %78 : vector<128x1xf32> to vector<128x8xf32>
    %80 = arith.subf %76, %79 : vector<128x8xf32>
    %81 = math.exp %80 : vector<128x8xf32>
    %cst_28 = arith.constant dense<0.000000e+00> : vector<128xf32>
    %82 = vector.multi_reduction <add>, %81, %cst_28 [1] : vector<128x8xf32> to vector<128xf32>
    %83 = vector.shape_cast %82 : vector<128xf32> to vector<128x1xf32>
    %84 = tpu.reciprocal %83 {approx = true} : vector<128x1xf32> -> vector<128x1xf32>
    %85 = vector.broadcast %84 : vector<128x1xf32> to vector<128x8xf32>
    %86 = arith.mulf %81, %85 : vector<128x8xf32>
    %cst_29 = arith.constant dense<0.000000e+00> : vector<8xf32>
    %87 = vector.multi_reduction <add>, %86, %cst_29 [0] : vector<128x8xf32> to vector<8xf32>
    %88 = vector.shape_cast %87 : vector<8xf32> to vector<1x8xf32>
    %cst_30 = arith.constant 9.99999997E-7 : f32
    %89 = vector.broadcast %cst_30 : f32 to vector<1x8xf32>
    %90 = arith.addf %88, %89 : vector<1x8xf32>
    %91 = tpu.reciprocal %90 {approx = true} : vector<1x8xf32> -> vector<1x8xf32>
    %92 = vector.broadcast %91 : vector<1x8xf32> to vector<128x8xf32>
    %93 = arith.mulf %86, %92 : vector<128x8xf32>
    %cst_31 = arith.constant dense<0.000000e+00> : vector<8x3xf32>
    %94 = tpu.matmul %93, %51, %cst_31 {dimension_numbers = #tpu.dot_dimension_numbers<[0], [0], [1], [1], [0, 1, 1, 1], [], []>} : vector<128x8xf32>, vector<128x3xf32>, vector<8x3xf32> -> vector<8x3xf32>
    %95 = arith.truncf %93 : vector<128x8xf32> to vector<128x8xbf16>
    %96 = arith.truncf %45 : vector<128x128xf32> to vector<128x128xbf16>
    %cst_32 = arith.constant dense<0.000000e+00> : vector<8x128xf32>
    %97 = tpu.matmul %95, %96, %cst_32 {dimension_numbers = #tpu.dot_dimension_numbers<[0], [0], [1], [1], [0, 1, 1, 1], [], []>} : vector<128x8xbf16>, vector<128x128xbf16>, vector<8x128xf32> -> vector<8x128xf32>
    %cst_33 = arith.constant 1.000000e+00 : f32
    %98 = vector.broadcast %cst_33 : f32 to vector<1x3xf32>
    %99 = arith.mulf %1, %1 : vector<128x3xf32>
    %cst_34 = arith.constant dense<0.000000e+00> : vector<1x128xf32>
    %100 = tpu.matmul %98, %99, %cst_34 {dimension_numbers = #tpu.dot_dimension_numbers<[1], [1], [0], [0], [0, 0, 1, 0], [], []>} : vector<1x3xf32>, vector<128x3xf32>, vector<1x128xf32> -> vector<1x128xf32>
    %cst_35 = arith.constant dense<0.000000e+00> : vector<8x128xf32>
    %101 = tpu.matmul %94, %1, %cst_35 {dimension_numbers = #tpu.dot_dimension_numbers<[1], [1], [0], [0], [0, 0, 1, 0], [], []>} : vector<8x3xf32>, vector<128x3xf32>, vector<8x128xf32> -> vector<8x128xf32>
    %102 = arith.mulf %94, %94 : vector<8x3xf32>
    %cst_36 = arith.constant dense<0.000000e+00> : vector<8xf32>
    %103 = vector.multi_reduction <add>, %102, %cst_36 [1] : vector<8x3xf32> to vector<8xf32>
    %104 = vector.shape_cast %103 : vector<8xf32> to vector<8x1xf32>
    %cst_37 = arith.constant 2.000000e+00 : f32
    %105 = vector.broadcast %cst_37 : f32 to vector<8x128xf32>
    %106 = arith.mulf %105, %101 : vector<8x128xf32>
    %107 = vector.broadcast %100 : vector<1x128xf32> to vector<8x128xf32>
    %108 = arith.subf %107, %106 : vector<8x128xf32>
    %109 = vector.broadcast %104 : vector<8x1xf32> to vector<8x128xf32>
    %110 = arith.addf %108, %109 : vector<8x128xf32>
    %cst_38 = arith.constant dense<0x7F800000> : vector<128xf32>
    %111 = vector.multi_reduction <minimumf>, %110, %cst_38 [0] : vector<8x128xf32> to vector<128xf32>
    %112 = vector.shape_cast %111 : vector<128xf32> to vector<1x128xf32>
    %cst_39 = arith.constant 0.000000e+00 : f32
    %113 = vector.broadcast %cst_39 : f32 to vector<1x128xf32>
    %114 = arith.maximumf %112, %113 : vector<1x128xf32>
    %cst_40 = arith.constant 9.99999996E-13 : f32
    %115 = vector.broadcast %cst_40 : f32 to vector<1x128xf32>
    %116 = arith.addf %114, %115 : vector<1x128xf32>
    %117 = math.sqrt %116 : vector<1x128xf32>
    %cst_41 = arith.constant 0.000000e+00 : f32
    %118 = vector.broadcast %cst_41 : f32 to vector<8x128xf32>
    %119 = arith.subf %118, %110 : vector<8x128xf32>
    %cst_42 = arith.constant dense<0xFF800000> : vector<128xf32>
    %120 = vector.multi_reduction <maximumf>, %119, %cst_42 [0] : vector<8x128xf32> to vector<128xf32>
    %121 = vector.shape_cast %120 : vector<128xf32> to vector<1x128xf32>
    %122 = vector.broadcast %121 : vector<1x128xf32> to vector<8x128xf32>
    %123 = arith.subf %119, %122 : vector<8x128xf32>
    %124 = math.exp %123 : vector<8x128xf32>
    %cst_43 = arith.constant dense<0.000000e+00> : vector<128xf32>
    %125 = vector.multi_reduction <add>, %124, %cst_43 [0] : vector<8x128xf32> to vector<128xf32>
    %126 = vector.shape_cast %125 : vector<128xf32> to vector<1x128xf32>
    %127 = tpu.reciprocal %126 {approx = true} : vector<1x128xf32> -> vector<1x128xf32>
    %128 = vector.broadcast %127 : vector<1x128xf32> to vector<8x128xf32>
    %129 = arith.mulf %124, %128 : vector<8x128xf32>
    %130 = arith.truncf %12 : vector<1x128xf32> to vector<1x128xbf16>
    %131 = arith.truncf %97 : vector<8x128xf32> to vector<8x128xbf16>
    %cst_44 = arith.constant dense<0.000000e+00> : vector<1x8xf32>
    %132 = tpu.matmul %130, %131, %cst_44 {dimension_numbers = #tpu.dot_dimension_numbers<[1], [1], [0], [0], [0, 0, 1, 0], [], []>} : vector<1x128xbf16>, vector<8x128xbf16>, vector<1x8xf32> -> vector<1x8xf32>
    %cst_45 = arith.constant dense<0.000000e+00> : vector<1x128xf32>
    %133 = tpu.matmul %132, %129, %cst_45 {dimension_numbers = #tpu.dot_dimension_numbers<[1], [0], [0], [1], [0, 0, 1, 1], [], []>} : vector<1x8xf32>, vector<8x128xf32>, vector<1x128xf32> -> vector<1x128xf32>
    %134 = arith.truncf %11 : vector<1x128xf32> to vector<1x128xbf16>
    %cst_46 = arith.constant dense<0.000000e+00> : vector<1x128xf32>
    %135 = tpu.matmul %134, %36, %cst_46 {dimension_numbers = #tpu.dot_dimension_numbers<[1], [1], [0], [0], [0, 0, 1, 0], [], []>} : vector<1x128xbf16>, vector<128x128xbf16>, vector<1x128xf32> -> vector<1x128xf32>
    %136 = arith.truncf %13 : vector<1x128xf32> to vector<1x128xbf16>
    %cst_47 = arith.constant dense<0.000000e+00> : vector<1x128xf32>
    %137 = tpu.matmul %136, %42, %cst_47 {dimension_numbers = #tpu.dot_dimension_numbers<[1], [1], [0], [0], [0, 0, 1, 0], [], []>} : vector<1x128xbf16>, vector<128x128xbf16>, vector<1x128xf32> -> vector<1x128xf32>
    %138 = vector.broadcast %15 : vector<1x1xf32> to vector<1x128xf32>
    %139 = arith.addf %137, %138 : vector<1x128xf32>
    %140 = arith.addf %135, %133 : vector<1x128xf32>
    %141 = vector.broadcast %16 : vector<1x1xf32> to vector<1x128xf32>
    %142 = arith.mulf %139, %141 : vector<1x128xf32>
    %143 = arith.addf %140, %142 : vector<1x128xf32>
    %144 = vector.broadcast %17 : vector<1x1xf32> to vector<1x128xf32>
    %145 = arith.mulf %117, %144 : vector<1x128xf32>
    %146 = arith.addf %143, %145 : vector<1x128xf32>
    %147 = vector.broadcast %18 : vector<1x1xf32> to vector<1x128xf32>
    %148 = arith.addf %146, %147 : vector<1x128xf32>
    %c0_48 = arith.constant 0 : index
    %c0_49 = arith.constant 0 : index
    %c0_50 = arith.constant 0 : index
    %149 = vector.load %arg8[%c0_48, %c0_49, %c0_50] : memref<1x1x128xf32, #tpu.memory_space<vmem>>, vector<1x1x128xf32>
    %150 = vector.shape_cast %149 : vector<1x1x128xf32> to vector<1x128xf32>
    %151 = vector.shape_cast %148 : vector<1x128xf32> to vector<1x1x128xf32>
    tpu.vector_store %arg8[%c0_48, %c0_49, %c0_50], %151 {strides = array<i32>} : memref<1x1x128xf32, #tpu.memory_space<vmem>>, vector<1x1x128xf32>,
    return
  }
  func.func @transform_0(%arg0: i32) -> (i32, i32, i32) {
    %c0_i32 = arith.constant 0 : i32
    %c0_i32_0 = arith.constant 0 : i32
    %c0_i32_1 = arith.constant 0 : i32
    return %arg0, %c0_i32, %c0_i32_0 : i32, i32, i32
  }
  func.func @transform_1(%arg0: i32) -> (i32, i32) {
    %c0_i32 = arith.constant 0 : i32
    %c0_i32_0 = arith.constant 0 : i32
    %c0_i32_1 = arith.constant 0 : i32
    return %c0_i32, %c0_i32_0 : i32, i32
  }
  func.func @transform_2(%arg0: i32) -> (i32, i32) {
    %c0_i32 = arith.constant 0 : i32
    %c0_i32_0 = arith.constant 0 : i32
    %c0_i32_1 = arith.constant 0 : i32
    return %c0_i32, %c0_i32_0 : i32, i32
  }
  func.func @transform_3(%arg0: i32) -> (i32, i32) {
    %c0_i32 = arith.constant 0 : i32
    %c0_i32_0 = arith.constant 0 : i32
    %c0_i32_1 = arith.constant 0 : i32
    return %c0_i32, %c0_i32_0 : i32, i32
  }
  func.func @transform_4(%arg0: i32) -> (i32, i32) {
    %c0_i32 = arith.constant 0 : i32
    %c0_i32_0 = arith.constant 0 : i32
    %c0_i32_1 = arith.constant 0 : i32
    return %c0_i32, %c0_i32_0 : i32, i32
  }
  func.func @transform_5(%arg0: i32) -> (i32, i32) {
    %c0_i32 = arith.constant 0 : i32
    %c0_i32_0 = arith.constant 0 : i32
    %c0_i32_1 = arith.constant 0 : i32
    return %c0_i32, %c0_i32_0 : i32, i32
  }
  func.func @transform_6(%arg0: i32) -> (i32, i32) {
    %c0_i32 = arith.constant 0 : i32
    %c0_i32_0 = arith.constant 0 : i32
    %c0_i32_1 = arith.constant 0 : i32
    return %c0_i32, %c0_i32_0 : i32, i32
  }
  func.func @transform_7(%arg0: i32) -> (i32, i32, i32) {
    %c0_i32 = arith.constant 0 : i32
    %c0_i32_0 = arith.constant 0 : i32
    %c0_i32_1 = arith.constant 0 : i32
    return %arg0, %c0_i32, %c0_i32_0 : i32, i32, i32
  }
}

</mosaic_0001>

<llo_original>
// kernel: tpu_custom_call.1
$region0: #{tpu_custom_call.1}
  #allocation0 [shape = 'u32[]', space=smem, size = 0x4, offset = 0x4, fixed_abs, tag = 'smem constant byte address 0x4 - core index']
  #allocation1 [shape = 'u32[144,128]{1,0:T(1,128)}', space=vmem, size = 0x12000, scoped, tag = 'internal scratch']
  %s0 = inlined_call_operand.vmem [shape: f32[2,128,3], index: 0, kind: input, shape index: {}]
  %s1 = inlined_call_operand.vmem [shape: f32[3,128], index: 1, kind: input, shape index: {}]
  %s2 = inlined_call_operand.vmem [shape: bf16[128,128], index: 2, kind: input, shape index: {}]
  %s3 = inlined_call_operand.vmem [shape: bf16[128,128], index: 3, kind: input, shape index: {}]
  %s4 = inlined_call_operand.vmem [shape: bf16[128,8], index: 4, kind: input, shape index: {}]
  %s5 = inlined_call_operand.vmem [shape: f32[8,128], index: 5, kind: input, shape index: {}]
  %s6 = inlined_call_operand.vmem [shape: f32[4,8], index: 6, kind: input, shape index: {}]
  %s7 = inlined_call_operand.hbm [shape: f32[2,1,128], index: 7, kind: output, shape index: {}]
  %s8 = sld [smem:[#allocation0]]
  $region61: #{tpu_custom_call.1} parent=0
    _
  %s10 = ssub.s32 1, %s8
  %s11 = scalar_select 0, %s10, %s8
  $region1: #{tpu_custom_call.1} parent=0
    #allocation2 [shape = 'u8[1024]{0}', space=vmem, size = 0x400, scoped, tag = 'output window, operand 0']
    #allocation3 [shape = 's32[2]{0}', space=sflag, size = 0x8, scoped, tag = 'scoped memory for tpu_custom_call.1']
    %12 = vsyncpa [#allocation3], 0
    %s13 = scalar_lea.sflag [#allocation3], 1
    %14 = vsyncpa %s13, 0
    loop: start=0, step=1, limit=4
    $region2: #{tpu_custom_call.1} parent=1 // loop_pre_header
      _
    $region3: #{tpu_custom_call.1} parent=1 // loop_header
      %s16 = sphi 0, %s20
      %p17 = scmp.ge.s32.totalorder %s16, 4
      %s26 = sphi 0, %s28
      %s29 = sphi 0, %s26
      %s30 = sphi 0, %s29
      %s46 = sphi 0, %s30
      %s50 = sphi 0, %s50
      %s52 = sphi 0, %s50
      %s53 = sphi 0, %s52
      %s67 = sphi 0, %s53
      %s71 = sphi 0, %s71
      %s73 = sphi 0, %s71
      %s74 = sphi 0, %s73
      %s88 = sphi 0, %s74
      %s92 = sphi 0, %s92
      %s94 = sphi 0, %s92
      %s95 = sphi 0, %s94
      %s109 = sphi 0, %s95
      %s113 = sphi 0, %s113
      %s115 = sphi 0, %s113
      %s116 = sphi 0, %s115
      %s130 = sphi 0, %s116
      %s134 = sphi 0, %s134
      %s136 = sphi 0, %s134
      %s137 = sphi 0, %s136
      %s151 = sphi 0, %s137
      %s155 = sphi 0, %s155
      %s157 = sphi 0, %s155
      %s158 = sphi 0, %s157
      %s172 = sphi 0, %s158
      %s178 = sphi 0, %s180
      %s181 = sphi 0, %s178
      %s182 = sphi 0, %s181
      %s198 = sphi 0, %s182
    $region4: #{tpu_custom_call.1} parent=1 // loop_header_branch
      %19 = sbr.rel (%p17) target = $region8
    $region5: #{tpu_custom_call.1} parent=1 // loop_body
      %s21 = ssub.s32 %s16, 1
      %s22 = ssub.s32 %s16, 2
      %s23 = sadd.s32 %s16, 1
      %s24 = ssub.s32 %s16, %s23
      %p25 = scmp.eq.s32.totalorder %s24, 0
      %s27 = sadd.s32 %s26, 1
      %s28 = scalar_select %p25, %s26, %s27
      %p31 = pneg %p25
      %p32 = scmp.eq.s32.totalorder %s16, 1
      %p33 = por %p31, %p32
      %p34 = scmp.ne.s32.totalorder %s26, %s29
      %p35 = scmp.eq.s32.totalorder %s16, 0
      %p36 = por %p34, %p35
      %p37 = scmp.ne.s32.totalorder %s26, %s29
      %p38 = scmp.eq.s32.totalorder %s21, 1
      %p39 = por %p37, %p38
      %p40 = scmp.ne.s32.totalorder %s29, %s30
      %p41 = scmp.eq.s32.totalorder %s21, 0
      %p42 = por %p40, %p41
      %p43 = scmp.ne.s32.totalorder %s29, %s30
      %p44 = scmp.eq.s32.totalorder %s22, 1
      %p45 = por %p43, %p44
      %p47 = scmp.ne.s32.totalorder %s30, %s46
      %p48 = scmp.eq.s32.totalorder %s22, 0
      %p49 = por %p47, %p48
      %s51 = sadd.s32 %s50, 1
      %p54 = scmp.eq.s32.totalorder %s16, 1
      %p55 = scmp.ne.s32.totalorder %s50, %s52
      %p56 = scmp.eq.s32.totalorder %s16, 0
      %p57 = por %p55, %p56
      %p58 = scmp.ne.s32.totalorder %s50, %s52
      %p59 = scmp.eq.s32.totalorder %s21, 1
      %p60 = por %p58, %p59
      %p61 = scmp.ne.s32.totalorder %s52, %s53
      %p62 = scmp.eq.s32.totalorder %s21, 0
      %p63 = por %p61, %p62
      %p64 = scmp.ne.s32.totalorder %s52, %s53
      %p65 = scmp.eq.s32.totalorder %s22, 1
      %p66 = por %p64, %p65
      %p68 = scmp.ne.s32.totalorder %s53, %s67
      %p69 = scmp.eq.s32.totalorder %s22, 0
      %p70 = por %p68, %p69
      %s72 = sadd.s32 %s71, 1
      %p75 = scmp.eq.s32.totalorder %s16, 1
      %p76 = scmp.ne.s32.totalorder %s71, %s73
      %p77 = scmp.eq.s32.totalorder %s16, 0
      %p78 = por %p76, %p77
      %p79 = scmp.ne.s32.totalorder %s71, %s73
      %p80 = scmp.eq.s32.totalorder %s21, 1
      %p81 = por %p79, %p80
      %p82 = scmp.ne.s32.totalorder %s73, %s74
      %p83 = scmp.eq.s32.totalorder %s21, 0
      %p84 = por %p82, %p83
      %p85 = scmp.ne.s32.totalorder %s73, %s74
      %p86 = scmp.eq.s32.totalorder %s22, 1
      %p87 = por %p85, %p86
      %p89 = scmp.ne.s32.totalorder %s74, %s88
      %p90 = scmp.eq.s32.totalorder %s22, 0
      %p91 = por %p89, %p90
      %s93 = sadd.s32 %s92, 1
      %p96 = scmp.eq.s32.totalorder %s16, 1
      %p97 = scmp.ne.s32.totalorder %s92, %s94
      %p98 = scmp.eq.s32.totalorder %s16, 0
      %p99 = por %p97, %p98
      %p100 = scmp.ne.s32.totalorder %s92, %s94
      %p101 = scmp.eq.s32.totalorder %s21, 1
      %p102 = por %p100, %p101
      %p103 = scmp.ne.s32.totalorder %s94, %s95
      %p104 = scmp.eq.s32.totalorder %s21, 0
      %p105 = por %p103, %p104
      %p106 = scmp.ne.s32.totalorder %s94, %s95
      %p107 = scmp.eq.s32.totalorder %s22, 1
      %p108 = por %p106, %p107
      %p110 = scmp.ne.s32.totalorder %s95, %s109
      %p111 = scmp.eq.s32.totalorder %s22, 0
      %p112 = por %p110, %p111
      %s114 = sadd.s32 %s113, 1
      %p117 = scmp.eq.s32.totalorder %s16, 1
      %p118 = scmp.ne.s32.totalorder %s113, %s115
      %p119 = scmp.eq.s32.totalorder %s16, 0
      %p120 = por %p118, %p119
      %p121 = scmp.ne.s32.totalorder %s113, %s115
      %p122 = scmp.eq.s32.totalorder %s21, 1
      %p123 = por %p121, %p122
      %p124 = scmp.ne.s32.totalorder %s115, %s116
      %p125 = scmp.eq.s32.totalorder %s21, 0
      %p126 = por %p124, %p125
      %p127 = scmp.ne.s32.totalorder %s115, %s116
      %p128 = scmp.eq.s32.totalorder %s22, 1
      %p129 = por %p127, %p128
      %p131 = scmp.ne.s32.totalorder %s116, %s130
      %p132 = scmp.eq.s32.totalorder %s22, 0
      %p133 = por %p131, %p132
      %s135 = sadd.s32 %s134, 1
      %p138 = scmp.eq.s32.totalorder %s16, 1
      %p139 = scmp.ne.s32.totalorder %s134, %s136
      %p140 = scmp.eq.s32.totalorder %s16, 0
      %p141 = por %p139, %p140
      %p142 = scmp.ne.s32.totalorder %s134, %s136
      %p143 = scmp.eq.s32.totalorder %s21, 1
      %p144 = por %p142, %p143
      %p145 = scmp.ne.s32.totalorder %s136, %s137
      %p146 = scmp.eq.s32.totalorder %s21, 0
      %p147 = por %p145, %p146
      %p148 = scmp.ne.s32.totalorder %s136, %s137
      %p149 = scmp.eq.s32.totalorder %s22, 1
      %p150 = por %p148, %p149
      %p152 = scmp.ne.s32.totalorder %s137, %s151
      %p153 = scmp.eq.s32.totalorder %s22, 0
      %p154 = por %p152, %p153
      %s156 = sadd.s32 %s155, 1
      %p159 = scmp.eq.s32.totalorder %s16, 1
      %p160 = scmp.ne.s32.totalorder %s155, %s157
      %p161 = scmp.eq.s32.totalorder %s16, 0
      %p162 = por %p160, %p161
      %p163 = scmp.ne.s32.totalorder %s155, %s157
      %p164 = scmp.eq.s32.totalorder %s21, 1
      %p165 = por %p163, %p164
      %p166 = scmp.ne.s32.totalorder %s157, %s158
      %p167 = scmp.eq.s32.totalorder %s21, 0
      %p168 = por %p166, %p167
      %p169 = scmp.ne.s32.totalorder %s157, %s158
      %p170 = scmp.eq.s32.totalorder %s22, 1
      %p171 = por %p169, %p170
      %p173 = scmp.ne.s32.totalorder %s158, %s172
      %p174 = scmp.eq.s32.totalorder %s22, 0
      %p175 = por %p173, %p174
      %s176 = ssub.s32 %s16, %s23
      %p177 = scmp.eq.s32.totalorder %s176, 0
      %s179 = sadd.s32 %s178, 1
      %s180 = scalar_select %p177, %s178, %s179
      %p183 = pneg %p177
      %p184 = scmp.eq.s32.totalorder %s16, 1
      %p185 = por %p183, %p184
      %p186 = scmp.ne.s32.totalorder %s178, %s181
      %p187 = scmp.eq.s32.totalorder %s16, 0
      %p188 = por %p186, %p187
      %p189 = scmp.ne.s32.totalorder %s178, %s181
      %p190 = scmp.eq.s32.totalorder %s21, 1
      %p191 = por %p189, %p190
      %p192 = scmp.ne.s32.totalorder %s181, %s182
      %p193 = scmp.eq.s32.totalorder %s21, 0
      %p194 = por %p192, %p193
      %p195 = scmp.ne.s32.totalorder %s181, %s182
      %p196 = scmp.eq.s32.totalorder %s22, 1
      %p197 = por %p195, %p196
      %p199 = scmp.ne.s32.totalorder %s182, %s198
      %p200 = scmp.eq.s32.totalorder %s22, 0
      %p201 = por %p199, %p200
      %p202 = scmp.le.s32.totalorder 1, %s16
      %p203 = scmp.lt.s32.totalorder %s16, 3
      %p204 = pnand %p202, %p203
      %p205 = pneg %p204
      // Predicated region
      $region9: #{tpu_custom_call.1} parent=5 // pred_check
        _
      $region10: #{tpu_custom_call.1} parent=5 // pred_check_branch
        %207 = sbr.rel (%p204) target = $region12
      $region11: #{tpu_custom_call.1} parent=5 // pred_region
        %s208 = ssub.s32 %s16, 1
        // Predicated region
        $region13: #{tpu_custom_call.1} parent=11 // pred_check
          %p209 = pneg %p63
        $region14: #{tpu_custom_call.1} parent=11 // pred_check_branch
          %211 = sbr.rel (%p209) target = $region16
        $region15: #{tpu_custom_call.1} parent=11 // pred_region
          _
        $region16: #{tpu_custom_call.1} parent=11 // pred_fallthru
          _
        // Predicated region
        $region17: #{tpu_custom_call.1} parent=11 // pred_check
          %p212 = pneg %p84
        $region18: #{tpu_custom_call.1} parent=11 // pred_check_branch
          %214 = sbr.rel (%p212) target = $region20
        $region19: #{tpu_custom_call.1} parent=11 // pred_region
          _
        $region20: #{tpu_custom_call.1} parent=11 // pred_fallthru
          _
        // Predicated region
        $region21: #{tpu_custom_call.1} parent=11 // pred_check
          %p215 = pneg %p105
        $region22: #{tpu_custom_call.1} parent=11 // pred_check_branch
          %217 = sbr.rel (%p215) target = $region24
        $region23: #{tpu_custom_call.1} parent=11 // pred_region
          _
        $region24: #{tpu_custom_call.1} parent=11 // pred_fallthru
          _
        // Predicated region
        $region25: #{tpu_custom_call.1} parent=11 // pred_check
          %p218 = pneg %p126
        $region26: #{tpu_custom_call.1} parent=11 // pred_check_branch
          %220 = sbr.rel (%p218) target = $region28
        $region27: #{tpu_custom_call.1} parent=11 // pred_region
          _
        $region28: #{tpu_custom_call.1} parent=11 // pred_fallthru
          _
        // Predicated region
        $region29: #{tpu_custom_call.1} parent=11 // pred_check
          %p221 = pneg %p147
        $region30: #{tpu_custom_call.1} parent=11 // pred_check_branch
          %223 = sbr.rel (%p221) target = $region32
        $region31: #{tpu_custom_call.1} parent=11 // pred_region
          _
        $region32: #{tpu_custom_call.1} parent=11 // pred_fallthru
          _
        // Predicated region
        $region33: #{tpu_custom_call.1} parent=11 // pred_check
          %p224 = pneg %p168
        $region34: #{tpu_custom_call.1} parent=11 // pred_check_branch
          %226 = sbr.rel (%p224) target = $region36
        $region35: #{tpu_custom_call.1} parent=11 // pred_region
          _
        $region36: #{tpu_custom_call.1} parent=11 // pred_fallthru
          _
      $region12: #{tpu_custom_call.1} parent=5 // pred_fallthru
        _
      %p227 = scmp.lt.s32.totalorder %s16, 2
      // Predicated region
      $region37: #{tpu_custom_call.1} parent=5 // pred_check
        %p228 = pneg %p227
      $region38: #{tpu_custom_call.1} parent=5 // pred_check_branch
        %230 = sbr.rel (%p228) target = $region40
      $region39: #{tpu_custom_call.1} parent=5 // pred_region
        // Predicated region
        $region41: #{tpu_custom_call.1} parent=39 // pred_check
          %p231 = pneg %p36
        $region42: #{tpu_custom_call.1} parent=39 // pred_check_branch
          %233 = sbr.rel (%p231) target = $region44
        $region43: #{tpu_custom_call.1} parent=39 // pred_region
          %p234 = scmp.lt.s32.totalorder %s16, 1
          %s235 = scalar_select %p234, %s16, 1
          %s236 = smul.addr %s235, 16
          %s237 = smul.addr %s236, 8
          %s238 = scalar_lea.vmem %s0, %s237
        $region44: #{tpu_custom_call.1} parent=39 // pred_fallthru
          _
      $region40: #{tpu_custom_call.1} parent=5 // pred_fallthru
        _
      %p239 = scmp.le.s32.totalorder 1, %s16
      %p240 = scmp.lt.s32.totalorder %s16, 3
      %p241 = pnand %p239, %p240
      %p242 = pneg %p241
      // Predicated region
      $region45: #{tpu_custom_call.1} parent=5 // pred_check
        _
      $region46: #{tpu_custom_call.1} parent=5 // pred_check_branch
        %244 = sbr.rel (%p241) target = $region48
      $region47: #{tpu_custom_call.1} parent=5 // pred_region
        %s245 = ssub.s32 %s16, 1
        %p246 = scmp.lt.s32.totalorder %s21, 1
        %s247 = scalar_select %p246, %s21, 1
        %s248 = smul.addr %s247, 16
        %s249 = smul.addr %s248, 8
        %s250 = scalar_lea.vmem %s0, %s249
        %p251 = pneg %p42
        %p252 = pneg %p39
        %p253 = pneg %p63
        %p254 = pneg %p60
        %p255 = pneg %p84
        %p256 = pneg %p81
        %p257 = pneg %p105
        %p258 = pneg %p102
        %p259 = pneg %p126
        %p260 = pneg %p123
        %p261 = pneg %p147
        %p262 = pneg %p144
        %p263 = pneg %p168
        %p264 = pneg %p165
        %p265 = pneg %p194
        %p266 = pneg %p191
        %s267 = sand.u32 %s181, 1
        %s268 = scalar_lea.sflag [#allocation3], %s267
        %s269 = sand.u32 %s181, 1
        %s270 = scalar_lea.vmem [#allocation2], %s269
        %p271 = scmp.lt.s32.totalorder %s21, 1
        %s272 = scalar_select %p271, %s21, 1
        %s273 = smul.addr %s272, 16
        %s274 = smul.addr %s273, 8
        %s275 = scalar_lea.vmem %s0, %s274
        %v277 = vld [vmem:[%s275] sm:$0xff]
        %v278 = vld [vmem:[%s275 + $0x8] sm:$0xff]
        %v279 = vld [vmem:[%s275 + $0x10] sm:$0xff]
        %v280 = vld [vmem:[%s275 + $0x18] sm:$0xff]
        %v281 = vld [vmem:[%s275 + $0x20] sm:$0xff]
        %v282 = vld [vmem:[%s275 + $0x28] sm:$0xff]
        %v283 = vld [vmem:[%s275 + $0x30] sm:$0xff]
        %v284 = vld [vmem:[%s275 + $0x38] sm:$0xff]
        %v285 = vld [vmem:[%s275 + $0x40] sm:$0xff]
        %v286 = vld [vmem:[%s275 + $0x48] sm:$0xff]
        %v287 = vld [vmem:[%s275 + $0x50] sm:$0xff]
        %v288 = vld [vmem:[%s275 + $0x58] sm:$0xff]
        %v289 = vld [vmem:[%s275 + $0x60] sm:$0xff]
        %v290 = vld [vmem:[%s275 + $0x68] sm:$0xff]
        %v291 = vld [vmem:[%s275 + $0x70] sm:$0xff]
        %v292 = vld [vmem:[%s275 + $0x78] sm:$0xff]
        %v293 = vld [vmem:[%s1] sm:$0x7]
        %v294 = vld [vmem:[%s2] sm:$0xf]
        %v295 = vld [vmem:[%s2 + $0x4] sm:$0xf]
        %v296 = vld [vmem:[%s2 + $0x8] sm:$0xf]
        %v297 = vld [vmem:[%s2 + $0xc] sm:$0xf]
        %v298 = vld [vmem:[%s2 + $0x10] sm:$0xf]
        %v299 = vld [vmem:[%s2 + $0x14] sm:$0xf]
        %v300 = vld [vmem:[%s2 + $0x18] sm:$0xf]
        %v301 = vld [vmem:[%s2 + $0x1c] sm:$0xf]
        %v302 = vld [vmem:[%s2 + $0x20] sm:$0xf]
        %v303 = vld [vmem:[%s2 + $0x24] sm:$0xf]
        %v304 = vld [vmem:[%s2 + $0x28] sm:$0xf]
        %v305 = vld [vmem:[%s2 + $0x2c] sm:$0xf]
        %v306 = vld [vmem:[%s2 + $0x30] sm:$0xf]
        %v307 = vld [vmem:[%s2 + $0x34] sm:$0xf]
        %v308 = vld [vmem:[%s2 + $0x38] sm:$0xf]
        %v309 = vld [vmem:[%s2 + $0x3c] sm:$0xf]
        %v310 = vld [vmem:[%s3] sm:$0xf]
        %v311 = vld [vmem:[%s3 + $0x4] sm:$0xf]
        %v312 = vld [vmem:[%s3 + $0x8] sm:$0xf]
        %v313 = vld [vmem:[%s3 + $0xc] sm:$0xf]
        %v314 = vld [vmem:[%s3 + $0x10] sm:$0xf]
        %v315 = vld [vmem:[%s3 + $0x14] sm:$0xf]
        %v316 = vld [vmem:[%s3 + $0x18] sm:$0xf]
        %v317 = vld [vmem:[%s3 + $0x1c] sm:$0xf]
        %v318 = vld [vmem:[%s3 + $0x20] sm:$0xf]
        %v319 = vld [vmem:[%s3 + $0x24] sm:$0xf]
        %v320 = vld [vmem:[%s3 + $0x28] sm:$0xf]
        %v321 = vld [vmem:[%s3 + $0x2c] sm:$0xf]
        %v322 = vld [vmem:[%s3 + $0x30] sm:$0xf]
        %v323 = vld [vmem:[%s3 + $0x34] sm:$0xf]
        %v324 = vld [vmem:[%s3 + $0x38] sm:$0xf]
        %v325 = vld [vmem:[%s3 + $0x3c] sm:$0xf]
        %v326 = vld [vmem:[%s4] sm:$0xf]
        %v327 = vld [vmem:[%s4 + $0x4] sm:$0xf]
        %v328 = vld [vmem:[%s4 + $0x8] sm:$0xf]
        %v329 = vld [vmem:[%s4 + $0xc] sm:$0xf]
        %v330 = vld [vmem:[%s4 + $0x10] sm:$0xf]
        %v331 = vld [vmem:[%s4 + $0x14] sm:$0xf]
        %v332 = vld [vmem:[%s4 + $0x18] sm:$0xf]
        %v333 = vld [vmem:[%s4 + $0x1c] sm:$0xf]
        %v334 = vld [vmem:[%s4 + $0x20] sm:$0xf]
        %v335 = vld [vmem:[%s4 + $0x24] sm:$0xf]
        %v336 = vld [vmem:[%s4 + $0x28] sm:$0xf]
        %v337 = vld [vmem:[%s4 + $0x2c] sm:$0xf]
        %v338 = vld [vmem:[%s4 + $0x30] sm:$0xf]
        %v339 = vld [vmem:[%s4 + $0x34] sm:$0xf]
        %v340 = vld [vmem:[%s4 + $0x38] sm:$0xf]
        %v341 = vld [vmem:[%s4 + $0x3c] sm:$0xf]
        %v342 = vld [vmem:[%s5] sm:$0xff]
        %v343 = vld [vmem:[%s6] sm:$0xf]
        %v344 = vlaneseq
        %v345 = vshrl.u32 %v344, 7
        %v346 = vsub.s32 0, %v345
        %v347 = vrot.slane %v342, %v346
        %vm348 = vcmask 23552
        %v350 = vsel %vm348, %v277, 0
        %v353 = vsel %vm348, %v278, 0
        %v356 = vsel %vm348, %v279, 0
        %v359 = vsel %vm348, %v280, 0
        %v362 = vsel %vm348, %v281, 0
        %v365 = vsel %vm348, %v282, 0
        %v368 = vsel %vm348, %v283, 0
        %v371 = vsel %vm348, %v284, 0
        %v374 = vsel %vm348, %v285, 0
        %v377 = vsel %vm348, %v286, 0
        %v380 = vsel %vm348, %v287, 0
        %v383 = vsel %vm348, %v288, 0
        %v386 = vsel %vm348, %v289, 0
        %v389 = vsel %vm348, %v290, 0
        %v392 = vsel %vm348, %v291, 0
        %v395 = vsel %vm348, %v292, 0
        %vm397 = vcmask 1042432
        %v399 = vsel %vm397, %v293, 0
        %401 = vmatprep.subr.mxu0 0.0
        %402 = vmatpush1.msra.mxu0 %v399
        %403 = vmatprep.subr.mxu0 0.0
        %404 = vmatpush1.msra.mxu0 0.0
        %405 = vmatprep.subr.mxu0 0.0
        %406 = vmatpush1.msra.mxu0 0.0
        %407 = vmatprep.subr.mxu0 0.0
        %408 = vmatpush1.msra.mxu0 0.0
        %409 = vmatprep.subr.mxu0 0.0
        %410 = vmatpush1.msra.mxu0 0.0
        %411 = vmatprep.subr.mxu0 0.0
        %412 = vmatpush1.msra.mxu0 0.0
        %413 = vmatprep.subr.mxu0 0.0
        %414 = vmatpush1.msra.mxu0 0.0
        %415 = vmatprep.subr.mxu0 0.0
        %416 = vmatpush1.msra.mxu0 0.0
        %417 = vmatprep.subr.mxu0 0.0
        %418 = vmatpush1.msra.mxu0 0.0
        %419 = vmatprep.subr.mxu0 0.0
        %420 = vmatpush1.msra.mxu0 0.0
        %421 = vmatprep.subr.mxu0 0.0
        %422 = vmatpush1.msra.mxu0 0.0
        %423 = vmatprep.subr.mxu0 0.0
        %424 = vmatpush1.msra.mxu0 0.0
        %425 = vmatprep.subr.mxu0 0.0
        %426 = vmatpush1.msra.mxu0 0.0
        %427 = vmatprep.subr.mxu0 0.0
        %428 = vmatpush1.msra.mxu0 0.0
        %429 = vmatprep.subr.mxu0 0.0
        %430 = vmatpush1.msra.mxu0 0.0
        %431 = vmatprep.subr.mxu0 0.0
        %432 = vmatpush1.msra.mxu0 0.0
        %433 = vmatprep.subr.mxu0 0.0
        %434 = vmatpush1.msra.mxu0 0.0
        %435 = vmatprep.subr.mxu0 0.0
        %436 = vmatpush1.msra.mxu0 0.0
        %437 = vmatprep.subr.mxu0 0.0
        %438 = vmatpush1.msra.mxu0 0.0
        %439 = vmatprep.subr.mxu0 0.0
        %440 = vmatpush1.msra.mxu0 0.0
        %441 = vmatprep.subr.mxu0 0.0
        %442 = vmatpush1.msra.mxu0 0.0
        %443 = vmatprep.subr.mxu0 0.0
        %444 = vmatpush1.msra.mxu0 0.0
        %445 = vmatprep.subr.mxu0 0.0
        %446 = vmatpush1.msra.mxu0 0.0
        %447 = vmatprep.subr.mxu0 0.0
        %448 = vmatpush1.msra.mxu0 0.0
        %449 = vmatprep.subr.mxu0 0.0
        %450 = vmatpush1.msra.mxu0 0.0
        %451 = vmatprep.subr.mxu0 0.0
        %452 = vmatpush1.msra.mxu0 0.0
        %453 = vmatprep.subr.mxu0 0.0
        %454 = vmatpush1.msra.mxu0 0.0
        %455 = vmatprep.subr.mxu0 0.0
        %456 = vmatpush1.msra.mxu0 0.0
        %457 = vmatprep.subr.mxu0 0.0
        %458 = vmatpush1.msra.mxu0 0.0
        %459 = vmatprep.subr.mxu0 0.0
        %460 = vmatpush1.msra.mxu0 0.0
        %461 = vmatprep.subr.mxu0 0.0
        %462 = vmatpush1.msra.mxu0 0.0
        %463 = vmatprep.subr.mxu0 0.0
        %464 = vmatpush1.msra.mxu0 0.0
        %465 = vmatprep.mubr.f32.mxu0 0.0
        %466 = vmatmul.mubr.f32.gmra.mrb[0].mxu0 %v350
        %v467 = vpop.f32.mrb[0].mxu0
        %v468 = vadd.f32 %v347, %v467
        %v469 = vpop.f32.mrb[0].mxu0
        %470 = vmatprep.mubr.f32.mxu0 0.0
        %471 = vmatmul.mubr.f32.gmra.mrb[0].mxu0 %v353
        %v472 = vpop.f32.mrb[0].mxu0
        %v473 = vadd.f32 %v347, %v472
        %v474 = vpop.f32.mrb[0].mxu0
        %475 = vmatprep.mubr.f32.mxu0 0.0
        %476 = vmatmul.mubr.f32.gmra.mrb[0].mxu0 %v356
        %v477 = vpop.f32.mrb[0].mxu0
        %v478 = vadd.f32 %v347, %v477
        %v479 = vpop.f32.mrb[0].mxu0
        %480 = vmatprep.mubr.f32.mxu0 0.0
        %481 = vmatmul.mubr.f32.gmra.mrb[0].mxu0 %v359
        %v482 = vpop.f32.mrb[0].mxu0
        %v483 = vadd.f32 %v347, %v482
        %v484 = vpop.f32.mrb[0].mxu0
        %485 = vmatprep.mubr.f32.mxu0 0.0
        %486 = vmatmul.mubr.f32.gmra.mrb[0].mxu0 %v362
        %v487 = vpop.f32.mrb[0].mxu0
        %v488 = vadd.f32 %v347, %v487
        %v489 = vpop.f32.mrb[0].mxu0
        %490 = vmatprep.mubr.f32.mxu0 0.0
        %491 = vmatmul.mubr.f32.gmra.mrb[0].mxu0 %v365
        %v492 = vpop.f32.mrb[0].mxu0
        %v493 = vadd.f32 %v347, %v492
        %v494 = vpop.f32.mrb[0].mxu0
        %495 = vmatprep.mubr.f32.mxu0 0.0
        %496 = vmatmul.mubr.f32.gmra.mrb[0].mxu0 %v368
        %v497 = vpop.f32.mrb[0].mxu0
        %v498 = vadd.f32 %v347, %v497
        %v499 = vpop.f32.mrb[0].mxu0
        %500 = vmatprep.mubr.f32.mxu0 0.0
        %501 = vmatmul.mubr.f32.gmra.mrb[0].mxu0 %v371
        %v502 = vpop.f32.mrb[0].mxu0
        %v503 = vadd.f32 %v347, %v502
        %v504 = vpop.f32.mrb[0].mxu0
        %505 = vmatprep.mubr.f32.mxu0 0.0
        %506 = vmatmul.mubr.f32.gmra.mrb[0].mxu0 %v374
        %v507 = vpop.f32.mrb[0].mxu0
        %v508 = vadd.f32 %v347, %v507
        %v509 = vpop.f32.mrb[0].mxu0
        %510 = vmatprep.mubr.f32.mxu0 0.0
        %511 = vmatmul.mubr.f32.gmra.mrb[0].mxu0 %v377
        %v512 = vpop.f32.mrb[0].mxu0
        %v513 = vadd.f32 %v347, %v512
        %v514 = vpop.f32.mrb[0].mxu0
        %515 = vmatprep.mubr.f32.mxu0 0.0
        %516 = vmatmul.mubr.f32.gmra.mrb[0].mxu0 %v380
        %v517 = vpop.f32.mrb[0].mxu0
        %v518 = vadd.f32 %v347, %v517
        %v519 = vpop.f32.mrb[0].mxu0
        %520 = vmatprep.mubr.f32.mxu0 0.0
        %521 = vmatmul.mubr.f32.gmra.mrb[0].mxu0 %v383
        %v522 = vpop.f32.mrb[0].mxu0
        %v523 = vadd.f32 %v347, %v522
        %v524 = vpop.f32.mrb[0].mxu0
        %525 = vmatprep.mubr.f32.mxu0 0.0
        %526 = vmatmul.mubr.f32.gmra.mrb[0].mxu0 %v386
        %v527 = vpop.f32.mrb[0].mxu0
        %v528 = vadd.f32 %v347, %v527
        %v529 = vpop.f32.mrb[0].mxu0
        %530 = vmatprep.mubr.f32.mxu0 0.0
        %531 = vmatmul.mubr.f32.gmra.mrb[0].mxu0 %v389
        %v532 = vpop.f32.mrb[0].mxu0
        %v533 = vadd.f32 %v347, %v532
        %v534 = vpop.f32.mrb[0].mxu0
        %535 = vmatprep.mubr.f32.mxu0 0.0
        %536 = vmatmul.mubr.f32.gmra.mrb[0].mxu0 %v392
        %v537 = vpop.f32.mrb[0].mxu0
        %v538 = vadd.f32 %v347, %v537
        %v539 = vpop.f32.mrb[0].mxu0
        %540 = vmatprep.mubr.f32.mxu0 0.0
        %541 = vmatmul.mubr.f32.gmra.mrb[0].mxu0 %v395
        %v542 = vpop.f32.mrb[0].mxu0
        %v543 = vadd.f32 %v347, %v542
        %v544 = vpop.f32.mrb[0].mxu0
        %545 = vdwg.mxu0
        %v546 = vmul.f32 %v468, %v468
        %v547 = vmul.f32 %v473, %v473
        %v548 = vmul.f32 %v478, %v478
        %v549 = vmul.f32 %v483, %v483
        %v550 = vmul.f32 %v488, %v488
        %v551 = vmul.f32 %v493, %v493
        %v552 = vmul.f32 %v498, %v498
        %v553 = vmul.f32 %v503, %v503
        %v554 = vmul.f32 %v508, %v508
        %v555 = vmul.f32 %v513, %v513
        %v556 = vmul.f32 %v518, %v518
        %v557 = vmul.f32 %v523, %v523
        %v558 = vmul.f32 %v528, %v528
        %v559 = vmul.f32 %v533, %v533
        %v560 = vmul.f32 %v538, %v538
        %v561 = vmul.f32 %v543, %v543
        %v562 = vmul.f32 %v468, %v546
        %v563 = vmul.f32 %v473, %v547
        %v564 = vmul.f32 %v478, %v548
        %v565 = vmul.f32 %v483, %v549
        %v566 = vmul.f32 %v488, %v550
        %v567 = vmul.f32 %v493, %v551
        %v568 = vmul.f32 %v498, %v552
        %v569 = vmul.f32 %v503, %v553
        %v570 = vmul.f32 %v508, %v554
        %v571 = vmul.f32 %v513, %v555
        %v572 = vmul.f32 %v518, %v556
        %v573 = vmul.f32 %v523, %v557
        %v574 = vmul.f32 %v528, %v558
        %v575 = vmul.f32 %v533, %v559
        %v576 = vmul.f32 %v538, %v560
        %v577 = vmul.f32 %v543, %v561
        %v578 = vmul.f32 %v562, 0.044715
        %v579 = vmul.f32 %v563, 0.044715
        %v580 = vmul.f32 %v564, 0.044715
        %v581 = vmul.f32 %v565, 0.044715
        %v582 = vmul.f32 %v566, 0.044715
        %v583 = vmul.f32 %v567, 0.044715
        %v584 = vmul.f32 %v568, 0.044715
        %v585 = vmul.f32 %v569, 0.044715
        %v586 = vmul.f32 %v570, 0.044715
        %v587 = vmul.f32 %v571, 0.044715
        %v588 = vmul.f32 %v572, 0.044715
        %v589 = vmul.f32 %v573, 0.044715
        %v590 = vmul.f32 %v574, 0.044715
        %v591 = vmul.f32 %v575, 0.044715
        %v592 = vmul.f32 %v576, 0.044715
        %v593 = vmul.f32 %v577, 0.044715
        %v594 = vadd.f32 %v468, %v578
        %v595 = vadd.f32 %v473, %v579
        %v596 = vadd.f32 %v478, %v580
        %v597 = vadd.f32 %v483, %v581
        %v598 = vadd.f32 %v488, %v582
        %v599 = vadd.f32 %v493, %v583
        %v600 = vadd.f32 %v498, %v584
        %v601 = vadd.f32 %v503, %v585
        %v602 = vadd.f32 %v508, %v586
        %v603 = vadd.f32 %v513, %v587
        %v604 = vadd.f32 %v518, %v588
        %v605 = vadd.f32 %v523, %v589
        %v606 = vadd.f32 %v528, %v590
        %v607 = vadd.f32 %v533, %v591
        %v608 = vadd.f32 %v538, %v592
        %v609 = vadd.f32 %v543, %v593
        %v610 = vmul.f32 %v594, 0.7978846
        %v611 = vmul.f32 %v595, 0.7978846
        %v612 = vmul.f32 %v596, 0.7978846
        %v613 = vmul.f32 %v597, 0.7978846
        %v614 = vmul.f32 %v598, 0.7978846
        %v615 = vmul.f32 %v599, 0.7978846
        %v616 = vmul.f32 %v600, 0.7978846
        %v617 = vmul.f32 %v601, 0.7978846
        %v618 = vmul.f32 %v602, 0.7978846
        %v619 = vmul.f32 %v603, 0.7978846
        %v620 = vmul.f32 %v604, 0.7978846
        %v621 = vmul.f32 %v605, 0.7978846
        %v622 = vmul.f32 %v606, 0.7978846
        %v623 = vmul.f32 %v607, 0.7978846
        %v624 = vmul.f32 %v608, 0.7978846
        %v625 = vmul.f32 %v609, 0.7978846
        %v626 = vtanh.pop %v610
        %v627 = vtanh.pop %v611
        %v628 = vtanh.pop %v612
        %v629 = vtanh.pop %v613
        %v630 = vtanh.pop %v614
        %v631 = vtanh.pop %v615
        %v632 = vtanh.pop %v616
        %v633 = vtanh.pop %v617
        %v634 = vtanh.pop %v618
        %v635 = vtanh.pop %v619
        %v636 = vtanh.pop %v620
        %v637 = vtanh.pop %v621
        %v638 = vtanh.pop %v622
        %v639 = vtanh.pop %v623
        %v640 = vtanh.pop %v624
        %v641 = vtanh.pop %v625
        %v642 = vadd.f32 %v626, 1.0
        %v643 = vadd.f32 %v627, 1.0
        %v644 = vadd.f32 %v628, 1.0
        %v645 = vadd.f32 %v629, 1.0
        %v646 = vadd.f32 %v630, 1.0
        %v647 = vadd.f32 %v631, 1.0
        %v648 = vadd.f32 %v632, 1.0
        %v649 = vadd.f32 %v633, 1.0
        %v650 = vadd.f32 %v634, 1.0
        %v651 = vadd.f32 %v635, 1.0
        %v652 = vadd.f32 %v636, 1.0
        %v653 = vadd.f32 %v637, 1.0
        %v654 = vadd.f32 %v638, 1.0
        %v655 = vadd.f32 %v639, 1.0
        %v656 = vadd.f32 %v640, 1.0
        %v657 = vadd.f32 %v641, 1.0
        %v658 = vmul.f32 %v642, 0.5
        %v659 = vmul.f32 %v643, 0.5
        %v660 = vmul.f32 %v644, 0.5
        %v661 = vmul.f32 %v645, 0.5
        %v662 = vmul.f32 %v646, 0.5
        %v663 = vmul.f32 %v647, 0.5
        %v664 = vmul.f32 %v648, 0.5
        %v665 = vmul.f32 %v649, 0.5
        %v666 = vmul.f32 %v650, 0.5
        %v667 = vmul.f32 %v651, 0.5
        %v668 = vmul.f32 %v652, 0.5
        %v669 = vmul.f32 %v653, 0.5
        %v670 = vmul.f32 %v654, 0.5
        %v671 = vmul.f32 %v655, 0.5
        %v672 = vmul.f32 %v656, 0.5
        %v673 = vmul.f32 %v657, 0.5
        %v674 = vmul.f32 %v468, %v658
        %v675 = vmul.f32 %v473, %v659
        %v676 = vmul.f32 %v478, %v660
        %v677 = vmul.f32 %v483, %v661
        %v678 = vmul.f32 %v488, %v662
        %v679 = vmul.f32 %v493, %v663
        %v680 = vmul.f32 %v498, %v664
        %v681 = vmul.f32 %v503, %v665
        %v682 = vmul.f32 %v508, %v666
        %v683 = vmul.f32 %v513, %v667
        %v684 = vmul.f32 %v518, %v668
        %v685 = vmul.f32 %v523, %v669
        %v686 = vmul.f32 %v528, %v670
        %v687 = vmul.f32 %v533, %v671
        %v688 = vmul.f32 %v538, %v672
        %v689 = vmul.f32 %v543, %v673
        %v690 = vpack.c.bf16 %v675, %v674
        %v691 = vpack.c.bf16 %v677, %v676
        %v692 = vpack.c.bf16 %v679, %v678
        %v693 = vpack.c.bf16 %v681, %v680
        %v694 = vpack.c.bf16 %v683, %v682
        %v695 = vpack.c.bf16 %v685, %v684
        %v696 = vpack.c.bf16 %v687, %v686
        %v697 = vpack.c.bf16 %v689, %v688
        %v698 = vlaneseq
        %v699 = vshrl.u32 %v698, 7
        %v700 = vsub.s32 1, %v699
        %v701 = vrot.slane %v342, %v700
        %v718 = vunpack.c.l.b16 %v294
        %v719 = vunpack.c.l.b16 %v295
        %v720 = vunpack.c.l.b16 %v296
        %v721 = vunpack.c.l.b16 %v297
        %v722 = vunpack.c.l.b16 %v298
        %v723 = vunpack.c.l.b16 %v299
        %v724 = vunpack.c.l.b16 %v300
        %v725 = vunpack.c.l.b16 %v301
        %v726 = vunpack.c.l.b16 %v302
        %v727 = vunpack.c.l.b16 %v303
        %v728 = vunpack.c.l.b16 %v304
        %v729 = vunpack.c.l.b16 %v305
        %v730 = vunpack.c.l.b16 %v306
        %v731 = vunpack.c.l.b16 %v307
        %v732 = vunpack.c.l.b16 %v308
        %v733 = vunpack.c.l.b16 %v309
        %v734 = vpack.c.b16 %v719, %v718
        %v735 = vpack.c.b16 %v721, %v720
        %v736 = vpack.c.b16 %v723, %v722
        %v737 = vpack.c.b16 %v725, %v724
        %v738 = vpack.c.b16 %v727, %v726
        %v739 = vpack.c.b16 %v729, %v728
        %v740 = vpack.c.b16 %v731, %v730
        %v741 = vpack.c.b16 %v733, %v732
        %750 = vmatprep.subr.bf16.mxu0 0
        %751 = vmatpush1.bf16.msra.mxu0 %v734
        %752 = vmatprep.subr.bf16.mxu0 0
        %753 = vmatpush1.bf16.msra.mxu0 %v735
        %754 = vmatprep.subr.bf16.mxu0 0
        %755 = vmatpush1.bf16.msra.mxu0 %v736
        %756 = vmatprep.subr.bf16.mxu0 0
        %757 = vmatpush1.bf16.msra.mxu0 %v737
        %758 = vmatprep.subr.bf16.mxu0 0
        %759 = vmatpush1.bf16.msra.mxu0 %v738
        %760 = vmatprep.subr.bf16.mxu0 0
        %761 = vmatpush1.bf16.msra.mxu0 %v739
        %762 = vmatprep.subr.bf16.mxu0 0
        %763 = vmatpush1.bf16.msra.mxu0 %v740
        %764 = vmatprep.subr.bf16.mxu0 0
        %765 = vmatpush1.bf16.msra.mxu0 %v741
        %766 = vmatprep.subr.bf16.mxu0 0
        %767 = vmatpush1.bf16.msra.mxu0 0
        %768 = vmatprep.subr.bf16.mxu0 0
        %769 = vmatpush1.bf16.msra.mxu0 0
        %770 = vmatprep.subr.bf16.mxu0 0
        %771 = vmatpush1.bf16.msra.mxu0 0
        %772 = vmatprep.subr.bf16.mxu0 0
        %773 = vmatpush1.bf16.msra.mxu0 0
        %774 = vmatprep.subr.bf16.mxu0 0
        %775 = vmatpush1.bf16.msra.mxu0 0
        %776 = vmatprep.subr.bf16.mxu0 0
        %777 = vmatpush1.bf16.msra.mxu0 0
        %778 = vmatprep.subr.bf16.mxu0 0
        %779 = vmatpush1.bf16.msra.mxu0 0
        %780 = vmatprep.subr.bf16.mxu0 0
        %781 = vmatpush1.bf16.msra.mxu0 0
        %782 = vmatprep.mubr.bf16.mxu0 0
        %783 = vmatmul.mubr.bf16.gmra.mrb[0].mxu0 %v690
        %v784 = vpop.f32.mrb[0].mxu0
        %v785 = vadd.f32 %v701, %v784
        %v786 = vpop.f32.mrb[0].mxu0
        %v787 = vpop.f32.mrb[0].mxu0
        %v788 = vadd.f32 %v701, %v787
        %v789 = vpop.f32.mrb[0].mxu0
        %790 = vmatprep.mubr.bf16.mxu0 0
        %791 = vmatmul.mubr.bf16.gmra.mrb[0].mxu0 %v691
        %v792 = vpop.f32.mrb[0].mxu0
        %v793 = vadd.f32 %v701, %v792
        %v794 = vpop.f32.mrb[0].mxu0
        %v795 = vpop.f32.mrb[0].mxu0
        %v796 = vadd.f32 %v701, %v795
        %v797 = vpop.f32.mrb[0].mxu0
        %798 = vmatprep.mubr.bf16.mxu0 0
        %799 = vmatmul.mubr.bf16.gmra.mrb[0].mxu0 %v692
        %v800 = vpop.f32.mrb[0].mxu0
        %v801 = vadd.f32 %v701, %v800
        %v802 = vpop.f32.mrb[0].mxu0
        %v803 = vpop.f32.mrb[0].mxu0
        %v804 = vadd.f32 %v701, %v803
        %v805 = vpop.f32.mrb[0].mxu0
        %806 = vmatprep.mubr.bf16.mxu0 0
        %807 = vmatmul.mubr.bf16.gmra.mrb[0].mxu0 %v693
        %v808 = vpop.f32.mrb[0].mxu0
        %v809 = vadd.f32 %v701, %v808
        %v810 = vpop.f32.mrb[0].mxu0
        %v811 = vpop.f32.mrb[0].mxu0
        %v812 = vadd.f32 %v701, %v811
        %v813 = vpop.f32.mrb[0].mxu0
        %814 = vmatprep.mubr.bf16.mxu0 0
        %815 = vmatmul.mubr.bf16.gmra.mrb[0].mxu0 %v694
        %v816 = vpop.f32.mrb[0].mxu0
        %v817 = vadd.f32 %v701, %v816
        %v818 = vpop.f32.mrb[0].mxu0
        %v819 = vpop.f32.mrb[0].mxu0
        %v820 = vadd.f32 %v701, %v819
        %v821 = vpop.f32.mrb[0].mxu0
        %822 = vmatprep.mubr.bf16.mxu0 0
        %823 = vmatmul.mubr.bf16.gmra.mrb[0].mxu0 %v695
        %v824 = vpop.f32.mrb[0].mxu0
        %v825 = vadd.f32 %v701, %v824
        %v826 = vpop.f32.mrb[0].mxu0
        %v827 = vpop.f32.mrb[0].mxu0
        %v828 = vadd.f32 %v701, %v827
        %v829 = vpop.f32.mrb[0].mxu0
        %830 = vmatprep.mubr.bf16.mxu0 0
        %831 = vmatmul.mubr.bf16.gmra.mrb[0].mxu0 %v696
        %v832 = vpop.f32.mrb[0].mxu0
        %v833 = vadd.f32 %v701, %v832
        %v834 = vpop.f32.mrb[0].mxu0
        %v835 = vpop.f32.mrb[0].mxu0
        %v836 = vadd.f32 %v701, %v835
        %v837 = vpop.f32.mrb[0].mxu0
        %838 = vmatprep.mubr.bf16.mxu0 0
        %839 = vmatmul.mubr.bf16.gmra.mrb[0].mxu0 %v697
        %v840 = vpop.f32.mrb[0].mxu0
        %v841 = vadd.f32 %v701, %v840
        %v842 = vpop.f32.mrb[0].mxu0
        %v843 = vpop.f32.mrb[0].mxu0
        %v844 = vadd.f32 %v701, %v843
        %v845 = vpop.f32.mrb[0].mxu0
        %846 = vdwg.mxu0
        %v847 = vmax.f32 %v785, 0.0
        %v848 = vmax.f32 %v788, 0.0
        %v849 = vmax.f32 %v793, 0.0
        %v850 = vmax.f32 %v796, 0.0
        %v851 = vmax.f32 %v801, 0.0
        %v852 = vmax.f32 %v804, 0.0
        %v853 = vmax.f32 %v809, 0.0
        %v854 = vmax.f32 %v812, 0.0
        %v855 = vmax.f32 %v817, 0.0
        %v856 = vmax.f32 %v820, 0.0
        %v857 = vmax.f32 %v825, 0.0
        %v858 = vmax.f32 %v828, 0.0
        %v859 = vmax.f32 %v833, 0.0
        %v860 = vmax.f32 %v836, 0.0
        %v861 = vmax.f32 %v841, 0.0
        %v862 = vmax.f32 %v844, 0.0
        %v863 = vpack.c.bf16 %v848, %v847
        %v864 = vpack.c.bf16 %v850, %v849
        %v865 = vpack.c.bf16 %v852, %v851
        %v866 = vpack.c.bf16 %v854, %v853
        %v867 = vpack.c.bf16 %v856, %v855
        %v868 = vpack.c.bf16 %v858, %v857
        %v869 = vpack.c.bf16 %v860, %v859
        %v870 = vpack.c.bf16 %v862, %v861
        %v871 = vlaneseq
        %v872 = vshrl.u32 %v871, 7
        %v873 = vsub.s32 2, %v872
        %v874 = vrot.slane %v342, %v873
        %v891 = vunpack.c.l.b16 %v310
        %v892 = vunpack.c.l.b16 %v311
        %v893 = vunpack.c.l.b16 %v312
        %v894 = vunpack.c.l.b16 %v313
        %v895 = vunpack.c.l.b16 %v314
        %v896 = vunpack.c.l.b16 %v315
        %v897 = vunpack.c.l.b16 %v316
        %v898 = vunpack.c.l.b16 %v317
        %v899 = vunpack.c.l.b16 %v318
        %v900 = vunpack.c.l.b16 %v319
        %v901 = vunpack.c.l.b16 %v320
        %v902 = vunpack.c.l.b16 %v321
        %v903 = vunpack.c.l.b16 %v322
        %v904 = vunpack.c.l.b16 %v323
        %v905 = vunpack.c.l.b16 %v324
        %v906 = vunpack.c.l.b16 %v325
        %v907 = vpack.c.b16 %v892, %v891
        %v908 = vpack.c.b16 %v894, %v893
        %v909 = vpack.c.b16 %v896, %v895
        %v910 = vpack.c.b16 %v898, %v897
        %v911 = vpack.c.b16 %v900, %v899
        %v912 = vpack.c.b16 %v902, %v901
        %v913 = vpack.c.b16 %v904, %v903
        %v914 = vpack.c.b16 %v906, %v905
        %923 = vmatprep.subr.bf16.mxu0 0
        %924 = vmatpush1.bf16.msra.mxu0 %v907
        %925 = vmatprep.subr.bf16.mxu0 0
        %926 = vmatpush1.bf16.msra.mxu0 %v908
        %927 = vmatprep.subr.bf16.mxu0 0
        %928 = vmatpush1.bf16.msra.mxu0 %v909
        %929 = vmatprep.subr.bf16.mxu0 0
        %930 = vmatpush1.bf16.msra.mxu0 %v910
        %931 = vmatprep.subr.bf16.mxu0 0
        %932 = vmatpush1.bf16.msra.mxu0 %v911
        %933 = vmatprep.subr.bf16.mxu0 0
        %934 = vmatpush1.bf16.msra.mxu0 %v912
        %935 = vmatprep.subr.bf16.mxu0 0
        %936 = vmatpush1.bf16.msra.mxu0 %v913
        %937 = vmatprep.subr.bf16.mxu0 0
        %938 = vmatpush1.bf16.msra.mxu0 %v914
        %939 = vmatprep.subr.bf16.mxu0 0
        %940 = vmatpush1.bf16.msra.mxu0 0
        %941 = vmatprep.subr.bf16.mxu0 0
        %942 = vmatpush1.bf16.msra.mxu0 0
        %943 = vmatprep.subr.bf16.mxu0 0
        %944 = vmatpush1.bf16.msra.mxu0 0
        %945 = vmatprep.subr.bf16.mxu0 0
        %946 = vmatpush1.bf16.msra.mxu0 0
        %947 = vmatprep.subr.bf16.mxu0 0
        %948 = vmatpush1.bf16.msra.mxu0 0
        %949 = vmatprep.subr.bf16.mxu0 0
        %950 = vmatpush1.bf16.msra.mxu0 0
        %951 = vmatprep.subr.bf16.mxu0 0
        %952 = vmatpush1.bf16.msra.mxu0 0
        %953 = vmatprep.subr.bf16.mxu0 0
        %954 = vmatpush1.bf16.msra.mxu0 0
        %955 = vmatprep.mubr.bf16.mxu0 0
        %956 = vmatmul.mubr.bf16.gmra.mrb[0].mxu0 %v863
        %v957 = vpop.f32.mrb[0].mxu0
        %v958 = vadd.f32 %v874, %v957
        %v959 = vpop.f32.mrb[0].mxu0
        %v960 = vpop.f32.mrb[0].mxu0
        %v961 = vadd.f32 %v874, %v960
        %v962 = vpop.f32.mrb[0].mxu0
        %963 = vmatprep.mubr.bf16.mxu0 0
        %964 = vmatmul.mubr.bf16.gmra.mrb[0].mxu0 %v864
        %v965 = vpop.f32.mrb[0].mxu0
        %v966 = vadd.f32 %v874, %v965
        %v967 = vpop.f32.mrb[0].mxu0
        %v968 = vpop.f32.mrb[0].mxu0
        %v969 = vadd.f32 %v874, %v968
        %v970 = vpop.f32.mrb[0].mxu0
        %971 = vmatprep.mubr.bf16.mxu0 0
        %972 = vmatmul.mubr.bf16.gmra.mrb[0].mxu0 %v865
        %v973 = vpop.f32.mrb[0].mxu0
        %v974 = vadd.f32 %v874, %v973
        %v975 = vpop.f32.mrb[0].mxu0
        %v976 = vpop.f32.mrb[0].mxu0
        %v977 = vadd.f32 %v874, %v976
        %v978 = vpop.f32.mrb[0].mxu0
        %979 = vmatprep.mubr.bf16.mxu0 0
        %980 = vmatmul.mubr.bf16.gmra.mrb[0].mxu0 %v866
        %v981 = vpop.f32.mrb[0].mxu0
        %v982 = vadd.f32 %v874, %v981
        %v983 = vpop.f32.mrb[0].mxu0
        %v984 = vpop.f32.mrb[0].mxu0
        %v985 = vadd.f32 %v874, %v984
        %v986 = vpop.f32.mrb[0].mxu0
        %987 = vmatprep.mubr.bf16.mxu0 0
        %988 = vmatmul.mubr.bf16.gmra.mrb[0].mxu0 %v867
        %v989 = vpop.f32.mrb[0].mxu0
        %v990 = vadd.f32 %v874, %v989
        %v991 = vpop.f32.mrb[0].mxu0
        %v992 = vpop.f32.mrb[0].mxu0
        %v993 = vadd.f32 %v874, %v992
        %v994 = vpop.f32.mrb[0].mxu0
        %995 = vmatprep.mubr.bf16.mxu0 0
        %996 = vmatmul.mubr.bf16.gmra.mrb[0].mxu0 %v868
        %v997 = vpop.f32.mrb[0].mxu0
        %v998 = vadd.f32 %v874, %v997
        %v999 = vpop.f32.mrb[0].mxu0
        %v1000 = vpop.f32.mrb[0].mxu0
        %v1001 = vadd.f32 %v874, %v1000
        %v1002 = vpop.f32.mrb[0].mxu0
        %1003 = vmatprep.mubr.bf16.mxu0 0
        %1004 = vmatmul.mubr.bf16.gmra.mrb[0].mxu0 %v869
        %v1005 = vpop.f32.mrb[0].mxu0
        %v1006 = vadd.f32 %v874, %v1005
        %v1007 = vpop.f32.mrb[0].mxu0
        %v1008 = vpop.f32.mrb[0].mxu0
        %v1009 = vadd.f32 %v874, %v1008
        %v1010 = vpop.f32.mrb[0].mxu0
        %1011 = vmatprep.mubr.bf16.mxu0 0
        %1012 = vmatmul.mubr.bf16.gmra.mrb[0].mxu0 %v870
        %v1013 = vpop.f32.mrb[0].mxu0
        %v1014 = vadd.f32 %v874, %v1013
        %v1015 = vpop.f32.mrb[0].mxu0
        %v1016 = vpop.f32.mrb[0].mxu0
        %v1017 = vadd.f32 %v874, %v1016
        %v1018 = vpop.f32.mrb[0].mxu0
        %1019 = vdwg.mxu0
        %v1020 = vlaneseq
        %v1021 = vshrl.u32 %v1020, 7
        %v1022 = vsub.s32 6, %v1021
        %v1023 = vrot.slane %v342, %v1022
        %v1040 = vunpack.c.l.b16 %v326
        %v1041 = vunpack.c.l.b16 %v327
        %v1042 = vunpack.c.l.b16 %v328
        %v1043 = vunpack.c.l.b16 %v329
        %v1044 = vunpack.c.l.b16 %v330
        %v1045 = vunpack.c.l.b16 %v331
        %v1046 = vunpack.c.l.b16 %v332
        %v1047 = vunpack.c.l.b16 %v333
        %v1048 = vunpack.c.l.b16 %v334
        %v1049 = vunpack.c.l.b16 %v335
        %v1050 = vunpack.c.l.b16 %v336
        %v1051 = vunpack.c.l.b16 %v337
        %v1052 = vunpack.c.l.b16 %v338
        %v1053 = vunpack.c.l.b16 %v339
        %v1054 = vunpack.c.l.b16 %v340
        %v1055 = vunpack.c.l.b16 %v341
        %v1056 = vpack.c.b16 %v1041, %v1040
        %v1057 = vpack.c.b16 %v1043, %v1042
        %v1058 = vpack.c.b16 %v1045, %v1044
        %v1059 = vpack.c.b16 %v1047, %v1046
        %v1060 = vpack.c.b16 %v1049, %v1048
        %v1061 = vpack.c.b16 %v1051, %v1050
        %v1062 = vpack.c.b16 %v1053, %v1052
        %v1063 = vpack.c.b16 %v1055, %v1054
        %1072 = vmatprep.subr.bf16.mxu0 0
        %1073 = vmatpush1.bf16.msra.mxu0 %v1056
        %1074 = vmatprep.subr.bf16.mxu0 0
        %1075 = vmatpush1.bf16.msra.mxu0 %v1057
        %1076 = vmatprep.subr.bf16.mxu0 0
        %1077 = vmatpush1.bf16.msra.mxu0 %v1058
        %1078 = vmatprep.subr.bf16.mxu0 0
        %1079 = vmatpush1.bf16.msra.mxu0 %v1059
        %1080 = vmatprep.subr.bf16.mxu0 0
        %1081 = vmatpush1.bf16.msra.mxu0 %v1060
        %1082 = vmatprep.subr.bf16.mxu0 0
        %1083 = vmatpush1.bf16.msra.mxu0 %v1061
        %1084 = vmatprep.subr.bf16.mxu0 0
        %1085 = vmatpush1.bf16.msra.mxu0 %v1062
        %1086 = vmatprep.subr.bf16.mxu0 0
        %1087 = vmatpush1.bf16.msra.mxu0 %v1063
        %1088 = vmatprep.subr.bf16.mxu0 0
        %1089 = vmatpush1.bf16.msra.mxu0 0
        %1090 = vmatprep.subr.bf16.mxu0 0
        %1091 = vmatpush1.bf16.msra.mxu0 0
        %1092 = vmatprep.subr.bf16.mxu0 0
        %1093 = vmatpush1.bf16.msra.mxu0 0
        %1094 = vmatprep.subr.bf16.mxu0 0
        %1095 = vmatpush1.bf16.msra.mxu0 0
        %1096 = vmatprep.subr.bf16.mxu0 0
        %1097 = vmatpush1.bf16.msra.mxu0 0
        %1098 = vmatprep.subr.bf16.mxu0 0
        %1099 = vmatpush1.bf16.msra.mxu0 0
        %1100 = vmatprep.subr.bf16.mxu0 0
        %1101 = vmatpush1.bf16.msra.mxu0 0
        %1102 = vmatprep.subr.bf16.mxu0 0
        %1103 = vmatpush1.bf16.msra.mxu0 0
        %1104 = vmatprep.mubr.bf16.mxu0 0
        %1105 = vmatmul.mubr.bf16.gmra.mrb[0].mxu0 %v863
        %v1106 = vpop.f32.mrb[0].mxu0
        %v1107 = vadd.f32 %v1023, %v1106
        %v1108 = vpop.f32.mrb[0].mxu0
        %v1109 = vpop.f32.mrb[0].mxu0
        %v1110 = vadd.f32 %v1023, %v1109
        %v1111 = vpop.f32.mrb[0].mxu0
        %1112 = vmatprep.mubr.bf16.mxu0 0
        %1113 = vmatmul.mubr.bf16.gmra.mrb[0].mxu0 %v864
        %v1114 = vpop.f32.mrb[0].mxu0
        %v1115 = vadd.f32 %v1023, %v1114
        %v1116 = vpop.f32.mrb[0].mxu0
        %v1117 = vpop.f32.mrb[0].mxu0
        %v1118 = vadd.f32 %v1023, %v1117
        %v1119 = vpop.f32.mrb[0].mxu0
        %1120 = vmatprep.mubr.bf16.mxu0 0
        %1121 = vmatmul.mubr.bf16.gmra.mrb[0].mxu0 %v865
        %v1122 = vpop.f32.mrb[0].mxu0
        %v1123 = vadd.f32 %v1023, %v1122
        %v1124 = vpop.f32.mrb[0].mxu0
        %v1125 = vpop.f32.mrb[0].mxu0
        %v1126 = vadd.f32 %v1023, %v1125
        %v1127 = vpop.f32.mrb[0].mxu0
        %1128 = vmatprep.mubr.bf16.mxu0 0
        %1129 = vmatmul.mubr.bf16.gmra.mrb[0].mxu0 %v866
        %v1130 = vpop.f32.mrb[0].mxu0
        %v1131 = vadd.f32 %v1023, %v1130
        %v1132 = vpop.f32.mrb[0].mxu0
        %v1133 = vpop.f32.mrb[0].mxu0
        %v1134 = vadd.f32 %v1023, %v1133
        %v1135 = vpop.f32.mrb[0].mxu0
        %1136 = vmatprep.mubr.bf16.mxu0 0
        %1137 = vmatmul.mubr.bf16.gmra.mrb[0].mxu0 %v867
        %v1138 = vpop.f32.mrb[0].mxu0
        %v1139 = vadd.f32 %v1023, %v1138
        %v1140 = vpop.f32.mrb[0].mxu0
        %v1141 = vpop.f32.mrb[0].mxu0
        %v1142 = vadd.f32 %v1023, %v1141
        %v1143 = vpop.f32.mrb[0].mxu0
        %1144 = vmatprep.mubr.bf16.mxu0 0
        %1145 = vmatmul.mubr.bf16.gmra.mrb[0].mxu0 %v868
        %v1146 = vpop.f32.mrb[0].mxu0
        %v1147 = vadd.f32 %v1023, %v1146
        %v1148 = vpop.f32.mrb[0].mxu0
        %v1149 = vpop.f32.mrb[0].mxu0
        %v1150 = vadd.f32 %v1023, %v1149
        %v1151 = vpop.f32.mrb[0].mxu0
        %1152 = vmatprep.mubr.bf16.mxu0 0
        %1153 = vmatmul.mubr.bf16.gmra.mrb[0].mxu0 %v869
        %v1154 = vpop.f32.mrb[0].mxu0
        %v1155 = vadd.f32 %v1023, %v1154
        %v1156 = vpop.f32.mrb[0].mxu0
        %v1157 = vpop.f32.mrb[0].mxu0
        %v1158 = vadd.f32 %v1023, %v1157
        %v1159 = vpop.f32.mrb[0].mxu0
        %1160 = vmatprep.mubr.bf16.mxu0 0
        %1161 = vmatmul.mubr.bf16.gmra.mrb[0].mxu0 %v870
        %v1162 = vpop.f32.mrb[0].mxu0
        %v1163 = vadd.f32 %v1023, %v1162
        %v1164 = vpop.f32.mrb[0].mxu0
        %v1165 = vpop.f32.mrb[0].mxu0
        %v1166 = vadd.f32 %v1023, %v1165
        %v1167 = vpop.f32.mrb[0].mxu0
        %1168 = vdwg.mxu0
        %v1169 = vadd.f32 %v277, %v1107
        %v1170 = vadd.f32 %v278, %v1110
        %v1171 = vadd.f32 %v279, %v1115
        %v1172 = vadd.f32 %v280, %v1118
        %v1173 = vadd.f32 %v281, %v1123
        %v1174 = vadd.f32 %v282, %v1126
        %v1175 = vadd.f32 %v283, %v1131
        %v1176 = vadd.f32 %v284, %v1134
        %v1177 = vadd.f32 %v285, %v1139
        %v1178 = vadd.f32 %v286, %v1142
        %v1179 = vadd.f32 %v287, %v1147
        %v1180 = vadd.f32 %v288, %v1150
        %v1181 = vadd.f32 %v289, %v1155
        %v1182 = vadd.f32 %v290, %v1158
        %v1183 = vadd.f32 %v291, %v1163
        %v1184 = vadd.f32 %v292, %v1166
        %1186 = vset.pattern.permute.xlu0 3
        %1187 = vperm.xlu0 %1186, %v1107
        %v1188 = vpop.permute.xlu0 %1187
        %1191 = vset.pattern.permute.xlu0 3
        %1192 = vperm.xlu0 %1191, %v1110
        %v1193 = vpop.permute.xlu0 %1192
        %1196 = vset.pattern.permute.xlu0 3
        %1197 = vperm.xlu0 %1196, %v1115
        %v1198 = vpop.permute.xlu0 %1197
        %1201 = vset.pattern.permute.xlu0 3
        %1202 = vperm.xlu0 %1201, %v1118
        %v1203 = vpop.permute.xlu0 %1202
        %1206 = vset.pattern.permute.xlu0 3
        %1207 = vperm.xlu0 %1206, %v1123
        %v1208 = vpop.permute.xlu0 %1207
        %1211 = vset.pattern.permute.xlu0 3
        %1212 = vperm.xlu0 %1211, %v1126
        %v1213 = vpop.permute.xlu0 %1212
        %1216 = vset.pattern.permute.xlu0 3
        %1217 = vperm.xlu0 %1216, %v1131
        %v1218 = vpop.permute.xlu0 %1217
        %1221 = vset.pattern.permute.xlu0 3
        %1222 = vperm.xlu0 %1221, %v1134
        %v1223 = vpop.permute.xlu0 %1222
        %1226 = vset.pattern.permute.xlu0 3
        %1227 = vperm.xlu0 %1226, %v1139
        %v1228 = vpop.permute.xlu0 %1227
        %1231 = vset.pattern.permute.xlu0 3
        %1232 = vperm.xlu0 %1231, %v1142
        %v1233 = vpop.permute.xlu0 %1232
        %1236 = vset.pattern.permute.xlu0 3
        %1237 = vperm.xlu0 %1236, %v1147
        %v1238 = vpop.permute.xlu0 %1237
        %1241 = vset.pattern.permute.xlu0 3
        %1242 = vperm.xlu0 %1241, %v1150
        %v1243 = vpop.permute.xlu0 %1242
        %1246 = vset.pattern.permute.xlu0 3
        %1247 = vperm.xlu0 %1246, %v1155
        %v1248 = vpop.permute.xlu0 %1247
        %1251 = vset.pattern.permute.xlu0 3
        %1252 = vperm.xlu0 %1251, %v1158
        %v1253 = vpop.permute.xlu0 %1252
        %1256 = vset.pattern.permute.xlu0 3
        %1257 = vperm.xlu0 %1256, %v1163
        %v1258 = vpop.permute.xlu0 %1257
        %1261 = vset.pattern.permute.xlu0 3
        %1262 = vperm.xlu0 %1261, %v1166
        %v1263 = vpop.permute.xlu0 %1262
        %v1265 = vlaneseq
        %v1266 = vshrl.u32 %v1265, 7
        %v1267 = vsub.s32 3, %v1266
        %v1268 = vrot.slane %v343, %v1267
        %v1269 = vmul.f32 %v1188, %v1268
        %v1270 = vmul.f32 %v1193, %v1268
        %v1271 = vmul.f32 %v1198, %v1268
        %v1272 = vmul.f32 %v1203, %v1268
        %v1273 = vmul.f32 %v1208, %v1268
        %v1274 = vmul.f32 %v1213, %v1268
        %v1275 = vmul.f32 %v1218, %v1268
        %v1276 = vmul.f32 %v1223, %v1268
        %v1277 = vmul.f32 %v1228, %v1268
        %v1278 = vmul.f32 %v1233, %v1268
        %v1279 = vmul.f32 %v1238, %v1268
        %v1280 = vmul.f32 %v1243, %v1268
        %v1281 = vmul.f32 %v1248, %v1268
        %v1282 = vmul.f32 %v1253, %v1268
        %v1283 = vmul.f32 %v1258, %v1268
        %v1284 = vmul.f32 %v1263, %v1268
        %v1286 = vsel %vm348, %v1169, 0
        %v1289 = vsel %vm348, %v1170, 0
        %v1292 = vsel %vm348, %v1171, 0
        %v1295 = vsel %vm348, %v1172, 0
        %v1298 = vsel %vm348, %v1173, 0
        %v1301 = vsel %vm348, %v1174, 0
        %v1304 = vsel %vm348, %v1175, 0
        %v1307 = vsel %vm348, %v1176, 0
        %v1310 = vsel %vm348, %v1177, 0
        %v1313 = vsel %vm348, %v1178, 0
        %v1316 = vsel %vm348, %v1179, 0
        %v1319 = vsel %vm348, %v1180, 0
        %v1322 = vsel %vm348, %v1181, 0
        %v1325 = vsel %vm348, %v1182, 0
        %v1328 = vsel %vm348, %v1183, 0
        %v1331 = vsel %vm348, %v1184, 0
        %v1334 = vsel %vm397, %v343, 0
        %1336 = vmatprep.subr.mxu0 0.0
        %1337 = vmatpush1.msra.mxu0 %v1334
        %1338 = vmatprep.subr.mxu0 0.0
        %1339 = vmatpush1.msra.mxu0 0.0
        %1340 = vmatprep.subr.mxu0 0.0
        %1341 = vmatpush1.msra.mxu0 0.0
        %1342 = vmatprep.subr.mxu0 0.0
        %1343 = vmatpush1.msra.mxu0 0.0
        %1344 = vmatprep.subr.mxu0 0.0
        %1345 = vmatpush1.msra.mxu0 0.0
        %1346 = vmatprep.subr.mxu0 0.0
        %1347 = vmatpush1.msra.mxu0 0.0
        %1348 = vmatprep.subr.mxu0 0.0
        %1349 = vmatpush1.msra.mxu0 0.0
        %1350 = vmatprep.subr.mxu0 0.0
        %1351 = vmatpush1.msra.mxu0 0.0
        %1352 = vmatprep.subr.mxu0 0.0
        %1353 = vmatpush1.msra.mxu0 0.0
        %1354 = vmatprep.subr.mxu0 0.0
        %1355 = vmatpush1.msra.mxu0 0.0
        %1356 = vmatprep.subr.mxu0 0.0
        %1357 = vmatpush1.msra.mxu0 0.0
        %1358 = vmatprep.subr.mxu0 0.0
        %1359 = vmatpush1.msra.mxu0 0.0
        %1360 = vmatprep.subr.mxu0 0.0
        %1361 = vmatpush1.msra.mxu0 0.0
        %1362 = vmatprep.subr.mxu0 0.0
        %1363 = vmatpush1.msra.mxu0 0.0
        %1364 = vmatprep.subr.mxu0 0.0
        %1365 = vmatpush1.msra.mxu0 0.0
        %1366 = vmatprep.subr.mxu0 0.0
        %1367 = vmatpush1.msra.mxu0 0.0
        %1368 = vmatprep.subr.mxu0 0.0
        %1369 = vmatpush1.msra.mxu0 0.0
        %1370 = vmatprep.subr.mxu0 0.0
        %1371 = vmatpush1.msra.mxu0 0.0
        %1372 = vmatprep.subr.mxu0 0.0
        %1373 = vmatpush1.msra.mxu0 0.0
        %1374 = vmatprep.subr.mxu0 0.0
        %1375 = vmatpush1.msra.mxu0 0.0
        %1376 = vmatprep.subr.mxu0 0.0
        %1377 = vmatpush1.msra.mxu0 0.0
        %1378 = vmatprep.subr.mxu0 0.0
        %1379 = vmatpush1.msra.mxu0 0.0
        %1380 = vmatprep.subr.mxu0 0.0
        %1381 = vmatpush1.msra.mxu0 0.0
        %1382 = vmatprep.subr.mxu0 0.0
        %1383 = vmatpush1.msra.mxu0 0.0
        %1384 = vmatprep.subr.mxu0 0.0
        %1385 = vmatpush1.msra.mxu0 0.0
        %1386 = vmatprep.subr.mxu0 0.0
        %1387 = vmatpush1.msra.mxu0 0.0
        %1388 = vmatprep.subr.mxu0 0.0
        %1389 = vmatpush1.msra.mxu0 0.0
        %1390 = vmatprep.subr.mxu0 0.0
        %1391 = vmatpush1.msra.mxu0 0.0
        %1392 = vmatprep.subr.mxu0 0.0
        %1393 = vmatpush1.msra.mxu0 0.0
        %1394 = vmatprep.subr.mxu0 0.0
        %1395 = vmatpush1.msra.mxu0 0.0
        %1396 = vmatprep.subr.mxu0 0.0
        %1397 = vmatpush1.msra.mxu0 0.0
        %1398 = vmatprep.subr.mxu0 0.0
        %1399 = vmatpush1.msra.mxu0 0.0
        %1400 = vmatprep.mubr.f32.mxu0 0.0
        %1401 = vmatmul.mubr.f32.gmra.mrb[0].mxu0 %v1286
        %v1402 = vpop.f32.mrb[0].mxu0
        %v1403 = vadd.f32 %v1269, %v1402
        %v1404 = vpop.f32.mrb[0].mxu0
        %1405 = vmatprep.mubr.f32.mxu0 0.0
        %1406 = vmatmul.mubr.f32.gmra.mrb[0].mxu0 %v1289
        %v1407 = vpop.f32.mrb[0].mxu0
        %v1408 = vadd.f32 %v1270, %v1407
        %v1409 = vpop.f32.mrb[0].mxu0
        %1410 = vmatprep.mubr.f32.mxu0 0.0
        %1411 = vmatmul.mubr.f32.gmra.mrb[0].mxu0 %v1292
        %v1412 = vpop.f32.mrb[0].mxu0
        %v1413 = vadd.f32 %v1271, %v1412
        %v1414 = vpop.f32.mrb[0].mxu0
        %1415 = vmatprep.mubr.f32.mxu0 0.0
        %1416 = vmatmul.mubr.f32.gmra.mrb[0].mxu0 %v1295
        %v1417 = vpop.f32.mrb[0].mxu0
        %v1418 = vadd.f32 %v1272, %v1417
        %v1419 = vpop.f32.mrb[0].mxu0
        %1420 = vmatprep.mubr.f32.mxu0 0.0
        %1421 = vmatmul.mubr.f32.gmra.mrb[0].mxu0 %v1298
        %v1422 = vpop.f32.mrb[0].mxu0
        %v1423 = vadd.f32 %v1273, %v1422
        %v1424 = vpop.f32.mrb[0].mxu0
        %1425 = vmatprep.mubr.f32.mxu0 0.0
        %1426 = vmatmul.mubr.f32.gmra.mrb[0].mxu0 %v1301
        %v1427 = vpop.f32.mrb[0].mxu0
        %v1428 = vadd.f32 %v1274, %v1427
        %v1429 = vpop.f32.mrb[0].mxu0
        %1430 = vmatprep.mubr.f32.mxu0 0.0
        %1431 = vmatmul.mubr.f32.gmra.mrb[0].mxu0 %v1304
        %v1432 = vpop.f32.mrb[0].mxu0
        %v1433 = vadd.f32 %v1275, %v1432
        %v1434 = vpop.f32.mrb[0].mxu0
        %1435 = vmatprep.mubr.f32.mxu0 0.0
        %1436 = vmatmul.mubr.f32.gmra.mrb[0].mxu0 %v1307
        %v1437 = vpop.f32.mrb[0].mxu0
        %v1438 = vadd.f32 %v1276, %v1437
        %v1439 = vpop.f32.mrb[0].mxu0
        %1440 = vmatprep.mubr.f32.mxu0 0.0
        %1441 = vmatmul.mubr.f32.gmra.mrb[0].mxu0 %v1310
        %v1442 = vpop.f32.mrb[0].mxu0
        %v1443 = vadd.f32 %v1277, %v1442
        %v1444 = vpop.f32.mrb[0].mxu0
        %1445 = vmatprep.mubr.f32.mxu0 0.0
        %1446 = vmatmul.mubr.f32.gmra.mrb[0].mxu0 %v1313
        %v1447 = vpop.f32.mrb[0].mxu0
        %v1448 = vadd.f32 %v1278, %v1447
        %v1449 = vpop.f32.mrb[0].mxu0
        %1450 = vmatprep.mubr.f32.mxu0 0.0
        %1451 = vmatmul.mubr.f32.gmra.mrb[0].mxu0 %v1316
        %v1452 = vpop.f32.mrb[0].mxu0
        %v1453 = vadd.f32 %v1279, %v1452
        %v1454 = vpop.f32.mrb[0].mxu0
        %1455 = vmatprep.mubr.f32.mxu0 0.0
        %1456 = vmatmul.mubr.f32.gmra.mrb[0].mxu0 %v1319
        %v1457 = vpop.f32.mrb[0].mxu0
        %v1458 = vadd.f32 %v1280, %v1457
        %v1459 = vpop.f32.mrb[0].mxu0
        %1460 = vmatprep.mubr.f32.mxu0 0.0
        %1461 = vmatmul.mubr.f32.gmra.mrb[0].mxu0 %v1322
        %v1462 = vpop.f32.mrb[0].mxu0
        %v1463 = vadd.f32 %v1281, %v1462
        %v1464 = vpop.f32.mrb[0].mxu0
        %1465 = vmatprep.mubr.f32.mxu0 0.0
        %1466 = vmatmul.mubr.f32.gmra.mrb[0].mxu0 %v1325
        %v1467 = vpop.f32.mrb[0].mxu0
        %v1468 = vadd.f32 %v1282, %v1467
        %v1469 = vpop.f32.mrb[0].mxu0
        %1470 = vmatprep.mubr.f32.mxu0 0.0
        %1471 = vmatmul.mubr.f32.gmra.mrb[0].mxu0 %v1328
        %v1472 = vpop.f32.mrb[0].mxu0
        %v1473 = vadd.f32 %v1283, %v1472
        %v1474 = vpop.f32.mrb[0].mxu0
        %1475 = vmatprep.mubr.f32.mxu0 0.0
        %1476 = vmatmul.mubr.f32.gmra.mrb[0].mxu0 %v1331
        %v1477 = vpop.f32.mrb[0].mxu0
        %v1478 = vadd.f32 %v1284, %v1477
        %v1479 = vpop.f32.mrb[0].mxu0
        %1480 = vdwg.mxu0
        %v1481 = vmul.f32 %v1169, %v1169
        %v1482 = vmul.f32 %v1170, %v1170
        %v1483 = vmul.f32 %v1171, %v1171
        %v1484 = vmul.f32 %v1172, %v1172
        %v1485 = vmul.f32 %v1173, %v1173
        %v1486 = vmul.f32 %v1174, %v1174
        %v1487 = vmul.f32 %v1175, %v1175
        %v1488 = vmul.f32 %v1176, %v1176
        %v1489 = vmul.f32 %v1177, %v1177
        %v1490 = vmul.f32 %v1178, %v1178
        %v1491 = vmul.f32 %v1179, %v1179
        %v1492 = vmul.f32 %v1180, %v1180
        %v1493 = vmul.f32 %v1181, %v1181
        %v1494 = vmul.f32 %v1182, %v1182
        %v1495 = vmul.f32 %v1183, %v1183
        %v1496 = vmul.f32 %v1184, %v1184
        %v1497 = vsel %vm348, %v1481, 0.0
        %1498 = vadd.xlane.f32.xlu0 %v1497
        %v1499 = vpop.xlane.xlu0 %1498
        %v1500 = vsel %vm348, %v1482, 0.0
        %1501 = vadd.xlane.f32.xlu0 %v1500
        %v1502 = vpop.xlane.xlu0 %1501
        %v1503 = vsel %vm348, %v1483, 0.0
        %1504 = vadd.xlane.f32.xlu0 %v1503
        %v1505 = vpop.xlane.xlu0 %1504
        %v1506 = vsel %vm348, %v1484, 0.0
        %1507 = vadd.xlane.f32.xlu0 %v1506
        %v1508 = vpop.xlane.xlu0 %1507
        %v1509 = vsel %vm348, %v1485, 0.0
        %1510 = vadd.xlane.f32.xlu0 %v1509
        %v1511 = vpop.xlane.xlu0 %1510
        %v1512 = vsel %vm348, %v1486, 0.0
        %1513 = vadd.xlane.f32.xlu0 %v1512
        %v1514 = vpop.xlane.xlu0 %1513
        %v1515 = vsel %vm348, %v1487, 0.0
        %1516 = vadd.xlane.f32.xlu0 %v1515
        %v1517 = vpop.xlane.xlu0 %1516
        %v1518 = vsel %vm348, %v1488, 0.0
        %1519 = vadd.xlane.f32.xlu0 %v1518
        %v1520 = vpop.xlane.xlu0 %1519
        %v1521 = vsel %vm348, %v1489, 0.0
        %1522 = vadd.xlane.f32.xlu0 %v1521
        %v1523 = vpop.xlane.xlu0 %1522
        %v1524 = vsel %vm348, %v1490, 0.0
        %1525 = vadd.xlane.f32.xlu0 %v1524
        %v1526 = vpop.xlane.xlu0 %1525
        %v1527 = vsel %vm348, %v1491, 0.0
        %1528 = vadd.xlane.f32.xlu0 %v1527
        %v1529 = vpop.xlane.xlu0 %1528
        %v1530 = vsel %vm348, %v1492, 0.0
        %1531 = vadd.xlane.f32.xlu0 %v1530
        %v1532 = vpop.xlane.xlu0 %1531
        %v1533 = vsel %vm348, %v1493, 0.0
        %1534 = vadd.xlane.f32.xlu0 %v1533
        %v1535 = vpop.xlane.xlu0 %1534
        %v1536 = vsel %vm348, %v1494, 0.0
        %1537 = vadd.xlane.f32.xlu0 %v1536
        %v1538 = vpop.xlane.xlu0 %1537
        %v1539 = vsel %vm348, %v1495, 0.0
        %1540 = vadd.xlane.f32.xlu0 %v1539
        %v1541 = vpop.xlane.xlu0 %1540
        %v1542 = vsel %vm348, %v1496, 0.0
        %1543 = vadd.xlane.f32.xlu0 %v1542
        %v1544 = vpop.xlane.xlu0 %1543
        %v1545 = vmul.f32 %v1107, %v1107
        %v1546 = vmul.f32 %v1110, %v1110
        %v1547 = vmul.f32 %v1115, %v1115
        %v1548 = vmul.f32 %v1118, %v1118
        %v1549 = vmul.f32 %v1123, %v1123
        %v1550 = vmul.f32 %v1126, %v1126
        %v1551 = vmul.f32 %v1131, %v1131
        %v1552 = vmul.f32 %v1134, %v1134
        %v1553 = vmul.f32 %v1139, %v1139
        %v1554 = vmul.f32 %v1142, %v1142
        %v1555 = vmul.f32 %v1147, %v1147
        %v1556 = vmul.f32 %v1150, %v1150
        %v1557 = vmul.f32 %v1155, %v1155
        %v1558 = vmul.f32 %v1158, %v1158
        %v1559 = vmul.f32 %v1163, %v1163
        %v1560 = vmul.f32 %v1166, %v1166
        %v1561 = vadd.f32 %v1499, %v1545
        %v1562 = vadd.f32 %v1502, %v1546
        %v1563 = vadd.f32 %v1505, %v1547
        %v1564 = vadd.f32 %v1508, %v1548
        %v1565 = vadd.f32 %v1511, %v1549
        %v1566 = vadd.f32 %v1514, %v1550
        %v1567 = vadd.f32 %v1517, %v1551
        %v1568 = vadd.f32 %v1520, %v1552
        %v1569 = vadd.f32 %v1523, %v1553
        %v1570 = vadd.f32 %v1526, %v1554
        %v1571 = vadd.f32 %v1529, %v1555
        %v1572 = vadd.f32 %v1532, %v1556
        %v1573 = vadd.f32 %v1535, %v1557
        %v1574 = vadd.f32 %v1538, %v1558
        %v1575 = vadd.f32 %v1541, %v1559
        %v1576 = vadd.f32 %v1544, %v1560
        %v1577 = vmul.f32 %v343, %v343
        %vm1578 = vcmask 60416
        %v1579 = vsel %vm1578, %v1577, 0.0
        %v1580 = vrot.slane %v1579, 4
        %v1581 = vadd.f32 %v1579, %v1580
        %v1582 = vrot.slane %v1581, 2
        %v1583 = vadd.f32 %v1581, %v1582
        %v1584 = vrot.slane %v1583, 1
        %v1585 = vadd.f32 %v1583, %v1584
        %v1586 = vmul.f32 %v1403, 2.0
        %v1587 = vmul.f32 %v1408, 2.0
        %v1588 = vmul.f32 %v1413, 2.0
        %v1589 = vmul.f32 %v1418, 2.0
        %v1590 = vmul.f32 %v1423, 2.0
        %v1591 = vmul.f32 %v1428, 2.0
        %v1592 = vmul.f32 %v1433, 2.0
        %v1593 = vmul.f32 %v1438, 2.0
        %v1594 = vmul.f32 %v1443, 2.0
        %v1595 = vmul.f32 %v1448, 2.0
        %v1596 = vmul.f32 %v1453, 2.0
        %v1597 = vmul.f32 %v1458, 2.0
        %v1598 = vmul.f32 %v1463, 2.0
        %v1599 = vmul.f32 %v1468, 2.0
        %v1600 = vmul.f32 %v1473, 2.0
        %v1601 = vmul.f32 %v1478, 2.0
        %1603 = vset.pattern.permute.xlu0 3
        %1604 = vperm.xlu0 %1603, %v1561
        %v1605 = vpop.permute.xlu0 %1604
        %1608 = vset.pattern.permute.xlu0 3
        %1609 = vperm.xlu0 %1608, %v1562
        %v1610 = vpop.permute.xlu0 %1609
        %1613 = vset.pattern.permute.xlu0 3
        %1614 = vperm.xlu0 %1613, %v1563
        %v1615 = vpop.permute.xlu0 %1614
        %1618 = vset.pattern.permute.xlu0 3
        %1619 = vperm.xlu0 %1618, %v1564
        %v1620 = vpop.permute.xlu0 %1619
        %1623 = vset.pattern.permute.xlu0 3
        %1624 = vperm.xlu0 %1623, %v1565
        %v1625 = vpop.permute.xlu0 %1624
        %1628 = vset.pattern.permute.xlu0 3
        %1629 = vperm.xlu0 %1628, %v1566
        %v1630 = vpop.permute.xlu0 %1629
        %1633 = vset.pattern.permute.xlu0 3
        %1634 = vperm.xlu0 %1633, %v1567
        %v1635 = vpop.permute.xlu0 %1634
        %1638 = vset.pattern.permute.xlu0 3
        %1639 = vperm.xlu0 %1638, %v1568
        %v1640 = vpop.permute.xlu0 %1639
        %1643 = vset.pattern.permute.xlu0 3
        %1644 = vperm.xlu0 %1643, %v1569
        %v1645 = vpop.permute.xlu0 %1644
        %1648 = vset.pattern.permute.xlu0 3
        %1649 = vperm.xlu0 %1648, %v1570
        %v1650 = vpop.permute.xlu0 %1649
        %1653 = vset.pattern.permute.xlu0 3
        %1654 = vperm.xlu0 %1653, %v1571
        %v1655 = vpop.permute.xlu0 %1654
        %1658 = vset.pattern.permute.xlu0 3
        %1659 = vperm.xlu0 %1658, %v1572
        %v1660 = vpop.permute.xlu0 %1659
        %1663 = vset.pattern.permute.xlu0 3
        %1664 = vperm.xlu0 %1663, %v1573
        %v1665 = vpop.permute.xlu0 %1664
        %1668 = vset.pattern.permute.xlu0 3
        %1669 = vperm.xlu0 %1668, %v1574
        %v1670 = vpop.permute.xlu0 %1669
        %1673 = vset.pattern.permute.xlu0 3
        %1674 = vperm.xlu0 %1673, %v1575
        %v1675 = vpop.permute.xlu0 %1674
        %1678 = vset.pattern.permute.xlu0 3
        %1679 = vperm.xlu0 %1678, %v1576
        %v1680 = vpop.permute.xlu0 %1679
        %v1682 = vsub.f32 %v1605, %v1586
        %v1683 = vsub.f32 %v1610, %v1587
        %v1684 = vsub.f32 %v1615, %v1588
        %v1685 = vsub.f32 %v1620, %v1589
        %v1686 = vsub.f32 %v1625, %v1590
        %v1687 = vsub.f32 %v1630, %v1591
        %v1688 = vsub.f32 %v1635, %v1592
        %v1689 = vsub.f32 %v1640, %v1593
        %v1690 = vsub.f32 %v1645, %v1594
        %v1691 = vsub.f32 %v1650, %v1595
        %v1692 = vsub.f32 %v1655, %v1596
        %v1693 = vsub.f32 %v1660, %v1597
        %v1694 = vsub.f32 %v1665, %v1598
        %v1695 = vsub.f32 %v1670, %v1599
        %v1696 = vsub.f32 %v1675, %v1600
        %v1697 = vsub.f32 %v1680, %v1601
        %v1698 = vadd.f32 %v1682, %v1585
        %v1699 = vadd.f32 %v1683, %v1585
        %v1700 = vadd.f32 %v1684, %v1585
        %v1701 = vadd.f32 %v1685, %v1585
        %v1702 = vadd.f32 %v1686, %v1585
        %v1703 = vadd.f32 %v1687, %v1585
        %v1704 = vadd.f32 %v1688, %v1585
        %v1705 = vadd.f32 %v1689, %v1585
        %v1706 = vadd.f32 %v1690, %v1585
        %v1707 = vadd.f32 %v1691, %v1585
        %v1708 = vadd.f32 %v1692, %v1585
        %v1709 = vadd.f32 %v1693, %v1585
        %v1710 = vadd.f32 %v1694, %v1585
        %v1711 = vadd.f32 %v1695, %v1585
        %v1712 = vadd.f32 %v1696, %v1585
        %v1713 = vadd.f32 %v1697, %v1585
        %v1714 = vsub.f32 0.0, %v1698
        %v1715 = vsub.f32 0.0, %v1699
        %v1716 = vsub.f32 0.0, %v1700
        %v1717 = vsub.f32 0.0, %v1701
        %v1718 = vsub.f32 0.0, %v1702
        %v1719 = vsub.f32 0.0, %v1703
        %v1720 = vsub.f32 0.0, %v1704
        %v1721 = vsub.f32 0.0, %v1705
        %v1722 = vsub.f32 0.0, %v1706
        %v1723 = vsub.f32 0.0, %v1707
        %v1724 = vsub.f32 0.0, %v1708
        %v1725 = vsub.f32 0.0, %v1709
        %v1726 = vsub.f32 0.0, %v1710
        %v1727 = vsub.f32 0.0, %v1711
        %v1728 = vsub.f32 0.0, %v1712
        %v1729 = vsub.f32 0.0, %v1713
        %v1731 = vrot.slane %v342, 7
        %1732 = vrot.lane.b32.xlu0 %v1731, 125
        %v1733 = vpop.permute.xlu0 %1732
        %s1734 = vtos %v1733
        %v1735 = vstv %s1734
        %v1737 = vmul.f32 %v1714, %v1735
        %v1738 = vmul.f32 %v1715, %v1735
        %v1739 = vmul.f32 %v1716, %v1735
        %v1740 = vmul.f32 %v1717, %v1735
        %v1741 = vmul.f32 %v1718, %v1735
        %v1742 = vmul.f32 %v1719, %v1735
        %v1743 = vmul.f32 %v1720, %v1735
        %v1744 = vmul.f32 %v1721, %v1735
        %v1745 = vmul.f32 %v1722, %v1735
        %v1746 = vmul.f32 %v1723, %v1735
        %v1747 = vmul.f32 %v1724, %v1735
        %v1748 = vmul.f32 %v1725, %v1735
        %v1749 = vmul.f32 %v1726, %v1735
        %v1750 = vmul.f32 %v1727, %v1735
        %v1751 = vmul.f32 %v1728, %v1735
        %v1752 = vmul.f32 %v1729, %v1735
        %vm1753 = vcmask 64512
        %v1754 = vsel %vm1753, %v1737, -inf
        %1755 = vmax.xlane.f32.xlu0 %v1754
        %v1756 = vpop.xlane.xlu0 %1755
        %v1757 = vsel %vm1753, %v1738, -inf
        %1758 = vmax.xlane.f32.xlu0 %v1757
        %v1759 = vpop.xlane.xlu0 %1758
        %v1760 = vsel %vm1753, %v1739, -inf
        %1761 = vmax.xlane.f32.xlu0 %v1760
        %v1762 = vpop.xlane.xlu0 %1761
        %v1763 = vsel %vm1753, %v1740, -inf
        %1764 = vmax.xlane.f32.xlu0 %v1763
        %v1765 = vpop.xlane.xlu0 %1764
        %v1766 = vsel %vm1753, %v1741, -inf
        %1767 = vmax.xlane.f32.xlu0 %v1766
        %v1768 = vpop.xlane.xlu0 %1767
        %v1769 = vsel %vm1753, %v1742, -inf
        %1770 = vmax.xlane.f32.xlu0 %v1769
        %v1771 = vpop.xlane.xlu0 %1770
        %v1772 = vsel %vm1753, %v1743, -inf
        %1773 = vmax.xlane.f32.xlu0 %v1772
        %v1774 = vpop.xlane.xlu0 %1773
        %v1775 = vsel %vm1753, %v1744, -inf
        %1776 = vmax.xlane.f32.xlu0 %v1775
        %v1777 = vpop.xlane.xlu0 %1776
        %v1778 = vsel %vm1753, %v1745, -inf
        %1779 = vmax.xlane.f32.xlu0 %v1778
        %v1780 = vpop.xlane.xlu0 %1779
        %v1781 = vsel %vm1753, %v1746, -inf
        %1782 = vmax.xlane.f32.xlu0 %v1781
        %v1783 = vpop.xlane.xlu0 %1782
        %v1784 = vsel %vm1753, %v1747, -inf
        %1785 = vmax.xlane.f32.xlu0 %v1784
        %v1786 = vpop.xlane.xlu0 %1785
        %v1787 = vsel %vm1753, %v1748, -inf
        %1788 = vmax.xlane.f32.xlu0 %v1787
        %v1789 = vpop.xlane.xlu0 %1788
        %v1790 = vsel %vm1753, %v1749, -inf
        %1791 = vmax.xlane.f32.xlu0 %v1790
        %v1792 = vpop.xlane.xlu0 %1791
        %v1793 = vsel %vm1753, %v1750, -inf
        %1794 = vmax.xlane.f32.xlu0 %v1793
        %v1795 = vpop.xlane.xlu0 %1794
        %v1796 = vsel %vm1753, %v1751, -inf
        %1797 = vmax.xlane.f32.xlu0 %v1796
        %v1798 = vpop.xlane.xlu0 %1797
        %v1799 = vsel %vm1753, %v1752, -inf
        %1800 = vmax.xlane.f32.xlu0 %v1799
        %v1801 = vpop.xlane.xlu0 %1800
        %v1802 = vsub.f32 %v1737, %v1756
        %v1803 = vsub.f32 %v1738, %v1759
        %v1804 = vsub.f32 %v1739, %v1762
        %v1805 = vsub.f32 %v1740, %v1765
        %v1806 = vsub.f32 %v1741, %v1768
        %v1807 = vsub.f32 %v1742, %v1771
        %v1808 = vsub.f32 %v1743, %v1774
        %v1809 = vsub.f32 %v1744, %v1777
        %v1810 = vsub.f32 %v1745, %v1780
        %v1811 = vsub.f32 %v1746, %v1783
        %v1812 = vsub.f32 %v1747, %v1786
        %v1813 = vsub.f32 %v1748, %v1789
        %v1814 = vsub.f32 %v1749, %v1792
        %v1815 = vsub.f32 %v1750, %v1795
        %v1816 = vsub.f32 %v1751, %v1798
        %v1817 = vsub.f32 %v1752, %v1801
        %v1818 = vmul.f32 %v1802, 1.442695
        %v1819 = vpow.pop %v1818
        %v1820 = vmul.f32 %v1803, 1.442695
        %v1821 = vpow.pop %v1820
        %v1822 = vmul.f32 %v1804, 1.442695
        %v1823 = vpow.pop %v1822
        %v1824 = vmul.f32 %v1805, 1.442695
        %v1825 = vpow.pop %v1824
        %v1826 = vmul.f32 %v1806, 1.442695
        %v1827 = vpow.pop %v1826
        %v1828 = vmul.f32 %v1807, 1.442695
        %v1829 = vpow.pop %v1828
        %v1830 = vmul.f32 %v1808, 1.442695
        %v1831 = vpow.pop %v1830
        %v1832 = vmul.f32 %v1809, 1.442695
        %v1833 = vpow.pop %v1832
        %v1834 = vmul.f32 %v1810, 1.442695
        %v1835 = vpow.pop %v1834
        %v1836 = vmul.f32 %v1811, 1.442695
        %v1837 = vpow.pop %v1836
        %v1838 = vmul.f32 %v1812, 1.442695
        %v1839 = vpow.pop %v1838
        %v1840 = vmul.f32 %v1813, 1.442695
        %v1841 = vpow.pop %v1840
        %v1842 = vmul.f32 %v1814, 1.442695
        %v1843 = vpow.pop %v1842
        %v1844 = vmul.f32 %v1815, 1.442695
        %v1845 = vpow.pop %v1844
        %v1846 = vmul.f32 %v1816, 1.442695
        %v1847 = vpow.pop %v1846
        %v1848 = vmul.f32 %v1817, 1.442695
        %v1849 = vpow.pop %v1848
        %v1850 = vsel %vm1753, %v1819, 0.0
        %1851 = vadd.xlane.f32.xlu0 %v1850
        %v1852 = vpop.xlane.xlu0 %1851
        %v1853 = vsel %vm1753, %v1821, 0.0
        %1854 = vadd.xlane.f32.xlu0 %v1853
        %v1855 = vpop.xlane.xlu0 %1854
        %v1856 = vsel %vm1753, %v1823, 0.0
        %1857 = vadd.xlane.f32.xlu0 %v1856
        %v1858 = vpop.xlane.xlu0 %1857
        %v1859 = vsel %vm1753, %v1825, 0.0
        %1860 = vadd.xlane.f32.xlu0 %v1859
        %v1861 = vpop.xlane.xlu0 %1860
        %v1862 = vsel %vm1753, %v1827, 0.0
        %1863 = vadd.xlane.f32.xlu0 %v1862
        %v1864 = vpop.xlane.xlu0 %1863
        %v1865 = vsel %vm1753, %v1829, 0.0
        %1866 = vadd.xlane.f32.xlu0 %v1865
        %v1867 = vpop.xlane.xlu0 %1866
        %v1868 = vsel %vm1753, %v1831, 0.0
        %1869 = vadd.xlane.f32.xlu0 %v1868
        %v1870 = vpop.xlane.xlu0 %1869
        %v1871 = vsel %vm1753, %v1833, 0.0
        %1872 = vadd.xlane.f32.xlu0 %v1871
        %v1873 = vpop.xlane.xlu0 %1872
        %v1874 = vsel %vm1753, %v1835, 0.0
        %1875 = vadd.xlane.f32.xlu0 %v1874
        %v1876 = vpop.xlane.xlu0 %1875
        %v1877 = vsel %vm1753, %v1837, 0.0
        %1878 = vadd.xlane.f32.xlu0 %v1877
        %v1879 = vpop.xlane.xlu0 %1878
        %v1880 = vsel %vm1753, %v1839, 0.0
        %1881 = vadd.xlane.f32.xlu0 %v1880
        %v1882 = vpop.xlane.xlu0 %1881
        %v1883 = vsel %vm1753, %v1841, 0.0
        %1884 = vadd.xlane.f32.xlu0 %v1883
        %v1885 = vpop.xlane.xlu0 %1884
        %v1886 = vsel %vm1753, %v1843, 0.0
        %1887 = vadd.xlane.f32.xlu0 %v1886
        %v1888 = vpop.xlane.xlu0 %1887
        %v1889 = vsel %vm1753, %v1845, 0.0
        %1890 = vadd.xlane.f32.xlu0 %v1889
        %v1891 = vpop.xlane.xlu0 %1890
        %v1892 = vsel %vm1753, %v1847, 0.0
        %1893 = vadd.xlane.f32.xlu0 %v1892
        %v1894 = vpop.xlane.xlu0 %1893
        %v1895 = vsel %vm1753, %v1849, 0.0
        %1896 = vadd.xlane.f32.xlu0 %v1895
        %v1897 = vpop.xlane.xlu0 %1896
        %v1898 = vrcp.pop %v1852
        %v1899 = vrcp.pop %v1855
        %v1900 = vrcp.pop %v1858
        %v1901 = vrcp.pop %v1861
        %v1902 = vrcp.pop %v1864
        %v1903 = vrcp.pop %v1867
        %v1904 = vrcp.pop %v1870
        %v1905 = vrcp.pop %v1873
        %v1906 = vrcp.pop %v1876
        %v1907 = vrcp.pop %v1879
        %v1908 = vrcp.pop %v1882
        %v1909 = vrcp.pop %v1885
        %v1910 = vrcp.pop %v1888
        %v1911 = vrcp.pop %v1891
        %v1912 = vrcp.pop %v1894
        %v1913 = vrcp.pop %v1897
        %v1914 = vmul.f32 %v1819, %v1898
        %v1915 = vmul.f32 %v1821, %v1899
        %v1916 = vmul.f32 %v1823, %v1900
        %v1917 = vmul.f32 %v1825, %v1901
        %v1918 = vmul.f32 %v1827, %v1902
        %v1919 = vmul.f32 %v1829, %v1903
        %v1920 = vmul.f32 %v1831, %v1904
        %v1921 = vmul.f32 %v1833, %v1905
        %v1922 = vmul.f32 %v1835, %v1906
        %v1923 = vmul.f32 %v1837, %v1907
        %v1924 = vmul.f32 %v1839, %v1908
        %v1925 = vmul.f32 %v1841, %v1909
        %v1926 = vmul.f32 %v1843, %v1910
        %v1927 = vmul.f32 %v1845, %v1911
        %v1928 = vmul.f32 %v1847, %v1912
        %v1929 = vmul.f32 %v1849, %v1913
        %v1930 = vsel %vm1753, %v1914, 0.0
        %v1931 = vsel %vm1753, %v1915, 0.0
        %v1932 = vadd.f32 %v1930, %v1931
        %v1933 = vsel %vm1753, %v1916, 0.0
        %v1934 = vadd.f32 %v1932, %v1933
        %v1935 = vsel %vm1753, %v1917, 0.0
        %v1936 = vadd.f32 %v1934, %v1935
        %v1937 = vsel %vm1753, %v1918, 0.0
        %v1938 = vadd.f32 %v1936, %v1937
        %v1939 = vsel %vm1753, %v1919, 0.0
        %v1940 = vadd.f32 %v1938, %v1939
        %v1941 = vsel %vm1753, %v1920, 0.0
        %v1942 = vadd.f32 %v1940, %v1941
        %v1943 = vsel %vm1753, %v1921, 0.0
        %v1944 = vadd.f32 %v1942, %v1943
        %v1945 = vsel %vm1753, %v1922, 0.0
        %v1946 = vadd.f32 %v1944, %v1945
        %v1947 = vsel %vm1753, %v1923, 0.0
        %v1948 = vadd.f32 %v1946, %v1947
        %v1949 = vsel %vm1753, %v1924, 0.0
        %v1950 = vadd.f32 %v1948, %v1949
        %v1951 = vsel %vm1753, %v1925, 0.0
        %v1952 = vadd.f32 %v1950, %v1951
        %v1953 = vsel %vm1753, %v1926, 0.0
        %v1954 = vadd.f32 %v1952, %v1953
        %v1955 = vsel %vm1753, %v1927, 0.0
        %v1956 = vadd.f32 %v1954, %v1955
        %v1957 = vsel %vm1753, %v1928, 0.0
        %v1958 = vadd.f32 %v1956, %v1957
        %v1959 = vsel %vm1753, %v1929, 0.0
        %v1960 = vadd.f32 %v1958, %v1959
        %v1961 = vrot.slane %v1960, 4
        %v1962 = vadd.f32 %v1960, %v1961
        %v1963 = vrot.slane %v1962, 2
        %v1964 = vadd.f32 %v1962, %v1963
        %v1965 = vrot.slane %v1964, 1
        %v1966 = vadd.f32 %v1964, %v1965
        %v1967 = vadd.f32 %v1966, 1e-06
        %v1968 = vrcp.pop %v1967
        %v1969 = vmul.f32 %v1914, %v1968
        %v1970 = vmul.f32 %v1915, %v1968
        %v1971 = vmul.f32 %v1916, %v1968
        %v1972 = vmul.f32 %v1917, %v1968
        %v1973 = vmul.f32 %v1918, %v1968
        %v1974 = vmul.f32 %v1919, %v1968
        %v1975 = vmul.f32 %v1920, %v1968
        %v1976 = vmul.f32 %v1921, %v1968
        %v1977 = vmul.f32 %v1922, %v1968
        %v1978 = vmul.f32 %v1923, %v1968
        %v1979 = vmul.f32 %v1924, %v1968
        %v1980 = vmul.f32 %v1925, %v1968
        %v1981 = vmul.f32 %v1926, %v1968
        %v1982 = vmul.f32 %v1927, %v1968
        %v1983 = vmul.f32 %v1928, %v1968
        %v1984 = vmul.f32 %v1929, %v1968
        %1985 = vxpose.xlu0.b32.start [1/16] %v1969, 128
        %1986 = vxpose.xlu0.b32.cont [2/16] %v1970, 128
        %1987 = vxpose.xlu0.b32.cont [3/16] %v1971, 128
        %1988 = vxpose.xlu0.b32.cont [4/16] %v1972, 128
        %1989 = vxpose.xlu0.b32.cont [5/16] %v1973, 128
        %1990 = vxpose.xlu0.b32.cont [6/16] %v1974, 128
        %1991 = vxpose.xlu0.b32.cont [7/16] %v1975, 128
        %1992 = vxpose.xlu0.b32.cont [8/16] %v1976, 128
        %1993 = vxpose.xlu0.b32.cont [9/16] %v1977, 128
        %1994 = vxpose.xlu0.b32.cont [10/16] %v1978, 128
        %1995 = vxpose.xlu0.b32.cont [11/16] %v1979, 128
        %1996 = vxpose.xlu0.b32.cont [12/16] %v1980, 128
        %1997 = vxpose.xlu0.b32.cont [13/16] %v1981, 128
        %1998 = vxpose.xlu0.b32.cont [14/16] %v1982, 128
        %1999 = vxpose.xlu0.b32.cont [15/16] %v1983, 128
        %2000 = vxpose.xlu0.b32.end [16/16] %v1984, 128
        %v2001 = vpop.trf.xlu0
        %v2002 = vpop.trf.xlu0
        %v2003 = vpop.trf.xlu0
        %v2004 = vpop.trf.xlu0
        %v2005 = vpop.trf.xlu0
        %v2006 = vpop.trf.xlu0
        %v2007 = vpop.trf.xlu0
        %v2008 = vpop.trf.xlu0
        %v2009 = vpop.trf.xlu0
        %v2010 = vpop.trf.xlu0
        %v2011 = vpop.trf.xlu0
        %v2012 = vpop.trf.xlu0
        %v2013 = vpop.trf.xlu0
        %v2014 = vpop.trf.xlu0
        %v2015 = vpop.trf.xlu0
        %v2016 = vpop.trf.xlu0
        %2017 = vmatprep.subr.mxu0 0.0
        %2018 = vmatpush1.msra.mxu0 %v1169
        %2019 = vmatprep.subr.mxu0 0.0
        %2020 = vmatpush1.msra.mxu0 %v1170
        %2021 = vmatprep.subr.mxu0 0.0
        %2022 = vmatpush1.msra.mxu0 %v1171
        %2023 = vmatprep.subr.mxu0 0.0
        %2024 = vmatpush1.msra.mxu0 %v1172
        %2025 = vmatprep.subr.mxu0 0.0
        %2026 = vmatpush1.msra.mxu0 %v1173
        %2027 = vmatprep.subr.mxu0 0.0
        %2028 = vmatpush1.msra.mxu0 %v1174
        %2029 = vmatprep.subr.mxu0 0.0
        %2030 = vmatpush1.msra.mxu0 %v1175
        %2031 = vmatprep.subr.mxu0 0.0
        %2032 = vmatpush1.msra.mxu0 %v1176
        %2033 = vmatprep.subr.mxu0 0.0
        %2034 = vmatpush1.msra.mxu0 %v1177
        %2035 = vmatprep.subr.mxu0 0.0
        %2036 = vmatpush1.msra.mxu0 %v1178
        %2037 = vmatprep.subr.mxu0 0.0
        %2038 = vmatpush1.msra.mxu0 %v1179
        %2039 = vmatprep.subr.mxu0 0.0
        %2040 = vmatpush1.msra.mxu0 %v1180
        %2041 = vmatprep.subr.mxu0 0.0
        %2042 = vmatpush1.msra.mxu0 %v1181
        %2043 = vmatprep.subr.mxu0 0.0
        %2044 = vmatpush1.msra.mxu0 %v1182
        %2045 = vmatprep.subr.mxu0 0.0
        %2046 = vmatpush1.msra.mxu0 %v1183
        %2047 = vmatprep.subr.mxu0 0.0
        %2048 = vmatpush1.msra.mxu0 %v1184
        %2049 = vmatprep.subr.mxu0 0.0
        %2050 = vmatpush1.msra.mxu0 0.0
        %2051 = vmatprep.subr.mxu0 0.0
        %2052 = vmatpush1.msra.mxu0 0.0
        %2053 = vmatprep.subr.mxu0 0.0
        %2054 = vmatpush1.msra.mxu0 0.0
        %2055 = vmatprep.subr.mxu0 0.0
        %2056 = vmatpush1.msra.mxu0 0.0
        %2057 = vmatprep.subr.mxu0 0.0
        %2058 = vmatpush1.msra.mxu0 0.0
        %2059 = vmatprep.subr.mxu0 0.0
        %2060 = vmatpush1.msra.mxu0 0.0
        %2061 = vmatprep.subr.mxu0 0.0
        %2062 = vmatpush1.msra.mxu0 0.0
        %2063 = vmatprep.subr.mxu0 0.0
        %2064 = vmatpush1.msra.mxu0 0.0
        %2065 = vmatprep.subr.mxu0 0.0
        %2066 = vmatpush1.msra.mxu0 0.0
        %2067 = vmatprep.subr.mxu0 0.0
        %2068 = vmatpush1.msra.mxu0 0.0
        %2069 = vmatprep.subr.mxu0 0.0
        %2070 = vmatpush1.msra.mxu0 0.0
        %2071 = vmatprep.subr.mxu0 0.0
        %2072 = vmatpush1.msra.mxu0 0.0
        %2073 = vmatprep.subr.mxu0 0.0
        %2074 = vmatpush1.msra.mxu0 0.0
        %2075 = vmatprep.subr.mxu0 0.0
        %2076 = vmatpush1.msra.mxu0 0.0
        %2077 = vmatprep.subr.mxu0 0.0
        %2078 = vmatpush1.msra.mxu0 0.0
        %2079 = vmatprep.subr.mxu0 0.0
        %2080 = vmatpush1.msra.mxu0 0.0
        %2081 = vmatprep.mubr.f32.mxu0 0.0
        %2082 = vmatmul.mubr.f32.gmra.mrb[0].mxu0 %v2001
        %v2083 = vpop.f32.mrb[0].mxu0
        %v2084 = vadd.f32 0.0, %v2083
        %v2085 = vpop.f32.mrb[0].mxu0
        %2086 = vdwg.mxu0
        %v2087 = vpack.c.bf16 %v1970, %v1969
        %v2088 = vpack.c.bf16 %v1972, %v1971
        %v2089 = vpack.c.bf16 %v1974, %v1973
        %v2090 = vpack.c.bf16 %v1976, %v1975
        %v2091 = vpack.c.bf16 %v1978, %v1977
        %v2092 = vpack.c.bf16 %v1980, %v1979
        %v2093 = vpack.c.bf16 %v1982, %v1981
        %v2094 = vpack.c.bf16 %v1984, %v1983
        %v2095 = vpack.c.bf16 %v961, %v958
        %v2096 = vpack.c.bf16 %v969, %v966
        %v2097 = vpack.c.bf16 %v977, %v974
        %v2098 = vpack.c.bf16 %v985, %v982
        %v2099 = vpack.c.bf16 %v993, %v990
        %v2100 = vpack.c.bf16 %v1001, %v998
        %v2101 = vpack.c.bf16 %v1009, %v1006
        %v2102 = vpack.c.bf16 %v1017, %v1014
        %2103 = vxpose.xlu0.c.b16.start [1/8] %v2087, 128
        %2104 = vxpose.xlu0.c.b16.cont [2/8] %v2088, 128
        %2105 = vxpose.xlu0.c.b16.cont [3/8] %v2089, 128
        %2106 = vxpose.xlu0.c.b16.cont [4/8] %v2090, 128
        %2107 = vxpose.xlu0.c.b16.cont [5/8] %v2091, 128
        %2108 = vxpose.xlu0.c.b16.cont [6/8] %v2092, 128
        %2109 = vxpose.xlu0.c.b16.cont [7/8] %v2093, 128
        %2110 = vxpose.xlu0.c.b16.end [8/8] %v2094, 128
        %v2111 = vpop.trf.xlu0
        %v2112 = vpop.trf.xlu0
        %v2113 = vpop.trf.xlu0
        %v2114 = vpop.trf.xlu0
        %v2115 = vpop.trf.xlu0
        %v2116 = vpop.trf.xlu0
        %v2117 = vpop.trf.xlu0
        %v2118 = vpop.trf.xlu0
        %2119 = vmatprep.subr.bf16.mxu0 0
        %2120 = vmatpush1.bf16.msra.mxu0 %v2095
        %2121 = vmatprep.subr.bf16.mxu0 0
        %2122 = vmatpush1.bf16.msra.mxu0 %v2096
        %2123 = vmatprep.subr.bf16.mxu0 0
        %2124 = vmatpush1.bf16.msra.mxu0 %v2097
        %2125 = vmatprep.subr.bf16.mxu0 0
        %2126 = vmatpush1.bf16.msra.mxu0 %v2098
        %2127 = vmatprep.subr.bf16.mxu0 0
        %2128 = vmatpush1.bf16.msra.mxu0 %v2099
        %2129 = vmatprep.subr.bf16.mxu0 0
        %2130 = vmatpush1.bf16.msra.mxu0 %v2100
        %2131 = vmatprep.subr.bf16.mxu0 0
        %2132 = vmatpush1.bf16.msra.mxu0 %v2101
        %2133 = vmatprep.subr.bf16.mxu0 0
        %2134 = vmatpush1.bf16.msra.mxu0 %v2102
        %2135 = vmatprep.subr.bf16.mxu0 0
        %2136 = vmatpush1.bf16.msra.mxu0 0
        %2137 = vmatprep.subr.bf16.mxu0 0
        %2138 = vmatpush1.bf16.msra.mxu0 0
        %2139 = vmatprep.subr.bf16.mxu0 0
        %2140 = vmatpush1.bf16.msra.mxu0 0
        %2141 = vmatprep.subr.bf16.mxu0 0
        %2142 = vmatpush1.bf16.msra.mxu0 0
        %2143 = vmatprep.subr.bf16.mxu0 0
        %2144 = vmatpush1.bf16.msra.mxu0 0
        %2145 = vmatprep.subr.bf16.mxu0 0
        %2146 = vmatpush1.bf16.msra.mxu0 0
        %2147 = vmatprep.subr.bf16.mxu0 0
        %2148 = vmatpush1.bf16.msra.mxu0 0
        %2149 = vmatprep.subr.bf16.mxu0 0
        %2150 = vmatpush1.bf16.msra.mxu0 0
        %2151 = vmatprep.mubr.bf16.mxu0 0
        %2152 = vmatmul.mubr.bf16.gmra.mrb[0].mxu0 %v2111
        %v2153 = vpop.f32.mrb[0].mxu0
        %v2154 = vadd.f32 0.0, %v2153
        %v2155 = vpop.f32.mrb[0].mxu0
        %v2156 = vpop.f32.mrb[0].mxu0
        %v2157 = vpop.f32.mrb[0].mxu0
        %2158 = vdwg.mxu0
        %v2159 = vmul.f32 %v277, %v277
        %v2160 = vmul.f32 %v278, %v278
        %v2161 = vmul.f32 %v279, %v279
        %v2162 = vmul.f32 %v280, %v280
        %v2163 = vmul.f32 %v281, %v281
        %v2164 = vmul.f32 %v282, %v282
        %v2165 = vmul.f32 %v283, %v283
        %v2166 = vmul.f32 %v284, %v284
        %v2167 = vmul.f32 %v285, %v285
        %v2168 = vmul.f32 %v286, %v286
        %v2169 = vmul.f32 %v287, %v287
        %v2170 = vmul.f32 %v288, %v288
        %v2171 = vmul.f32 %v289, %v289
        %v2172 = vmul.f32 %v290, %v290
        %v2173 = vmul.f32 %v291, %v291
        %v2174 = vmul.f32 %v292, %v292
        %v2176 = vsel %vm348, 1.0, 0
        %v2179 = vsel %vm348, %v2159, 0
        %v2182 = vsel %vm348, %v2160, 0
        %v2185 = vsel %vm348, %v2161, 0
        %v2188 = vsel %vm348, %v2162, 0
        %v2191 = vsel %vm348, %v2163, 0
        %v2194 = vsel %vm348, %v2164, 0
        %v2197 = vsel %vm348, %v2165, 0
        %v2200 = vsel %vm348, %v2166, 0
        %v2203 = vsel %vm348, %v2167, 0
        %v2206 = vsel %vm348, %v2168, 0
        %v2209 = vsel %vm348, %v2169, 0
        %v2212 = vsel %vm348, %v2170, 0
        %v2215 = vsel %vm348, %v2171, 0
        %v2218 = vsel %vm348, %v2172, 0
        %v2221 = vsel %vm348, %v2173, 0
        %v2224 = vsel %vm348, %v2174, 0
        %2226 = vmatprep.subr.mxu0 0.0
        %2227 = vmatpush1.xpose.msra.mxu0 %v2179
        %2228 = vmatprep.subr.mxu0 0.0
        %2229 = vmatpush1.xpose.msra.mxu0 %v2182
        %2230 = vmatprep.subr.mxu0 0.0
        %2231 = vmatpush1.xpose.msra.mxu0 %v2185
        %2232 = vmatprep.subr.mxu0 0.0
        %2233 = vmatpush1.xpose.msra.mxu0 %v2188
        %2234 = vmatprep.subr.mxu0 0.0
        %2235 = vmatpush1.xpose.msra.mxu0 %v2191
        %2236 = vmatprep.subr.mxu0 0.0
        %2237 = vmatpush1.xpose.msra.mxu0 %v2194
        %2238 = vmatprep.subr.mxu0 0.0
        %2239 = vmatpush1.xpose.msra.mxu0 %v2197
        %2240 = vmatprep.subr.mxu0 0.0
        %2241 = vmatpush1.xpose.msra.mxu0 %v2200
        %2242 = vmatprep.subr.mxu0 0.0
        %2243 = vmatpush1.xpose.msra.mxu0 %v2203
        %2244 = vmatprep.subr.mxu0 0.0
        %2245 = vmatpush1.xpose.msra.mxu0 %v2206
        %2246 = vmatprep.subr.mxu0 0.0
        %2247 = vmatpush1.xpose.msra.mxu0 %v2209
        %2248 = vmatprep.subr.mxu0 0.0
        %2249 = vmatpush1.xpose.msra.mxu0 %v2212
        %2250 = vmatprep.subr.mxu0 0.0
        %2251 = vmatpush1.xpose.msra.mxu0 %v2215
        %2252 = vmatprep.subr.mxu0 0.0
        %2253 = vmatpush1.xpose.msra.mxu0 %v2218
        %2254 = vmatprep.subr.mxu0 0.0
        %2255 = vmatpush1.xpose.msra.mxu0 %v2221
        %2256 = vmatprep.subr.mxu0 0.0
        %2257 = vmatpush1.xpose.msra.mxu0 %v2224
        %2258 = vmatprep.subr.mxu0 0.0
        %2259 = vmatpush1.xpose.msra.mxu0 0.0
        %2260 = vmatprep.subr.mxu0 0.0
        %2261 = vmatpush1.xpose.msra.mxu0 0.0
        %2262 = vmatprep.subr.mxu0 0.0
        %2263 = vmatpush1.xpose.msra.mxu0 0.0
        %2264 = vmatprep.subr.mxu0 0.0
        %2265 = vmatpush1.xpose.msra.mxu0 0.0
        %2266 = vmatprep.subr.mxu0 0.0
        %2267 = vmatpush1.xpose.msra.mxu0 0.0
        %2268 = vmatprep.subr.mxu0 0.0
        %2269 = vmatpush1.xpose.msra.mxu0 0.0
        %2270 = vmatprep.subr.mxu0 0.0
        %2271 = vmatpush1.xpose.msra.mxu0 0.0
        %2272 = vmatprep.subr.mxu0 0.0
        %2273 = vmatpush1.xpose.msra.mxu0 0.0
        %2274 = vmatprep.subr.mxu0 0.0
        %2275 = vmatpush1.xpose.msra.mxu0 0.0
        %2276 = vmatprep.subr.mxu0 0.0
        %2277 = vmatpush1.xpose.msra.mxu0 0.0
        %2278 = vmatprep.subr.mxu0 0.0
        %2279 = vmatpush1.xpose.msra.mxu0 0.0
        %2280 = vmatprep.subr.mxu0 0.0
        %2281 = vmatpush1.xpose.msra.mxu0 0.0
        %2282 = vmatprep.subr.mxu0 0.0
        %2283 = vmatpush1.xpose.msra.mxu0 0.0
        %2284 = vmatprep.subr.mxu0 0.0
        %2285 = vmatpush1.xpose.msra.mxu0 0.0
        %2286 = vmatprep.subr.mxu0 0.0
        %2287 = vmatpush1.xpose.msra.mxu0 0.0
        %2288 = vmatprep.subr.mxu0 0.0
        %2289 = vmatpush1.xpose.msra.mxu0 0.0
        %2290 = vmatprep.mubr.f32.mxu0 0.0
        %2291 = vmatmul.mubr.f32.gmra.mrb[0].mxu0 %v2176
        %v2292 = vpop.f32.mrb[0].mxu0
        %v2293 = vadd.f32 0.0, %v2292
        %v2294 = vpop.f32.mrb[0].mxu0
        %2295 = vdwg.mxu0
        %v2297 = vsel %vm348, %v2084, 0
        %2299 = vmatprep.subr.mxu0 0.0
        %2300 = vmatpush1.xpose.msra.mxu0 %v350
        %2301 = vmatprep.subr.mxu0 0.0
        %2302 = vmatpush1.xpose.msra.mxu0 %v353
        %2303 = vmatprep.subr.mxu0 0.0
        %2304 = vmatpush1.xpose.msra.mxu0 %v356
        %2305 = vmatprep.subr.mxu0 0.0
        %2306 = vmatpush1.xpose.msra.mxu0 %v359
        %2307 = vmatprep.subr.mxu0 0.0
        %2308 = vmatpush1.xpose.msra.mxu0 %v362
        %2309 = vmatprep.subr.mxu0 0.0
        %2310 = vmatpush1.xpose.msra.mxu0 %v365
        %2311 = vmatprep.subr.mxu0 0.0
        %2312 = vmatpush1.xpose.msra.mxu0 %v368
        %2313 = vmatprep.subr.mxu0 0.0
        %2314 = vmatpush1.xpose.msra.mxu0 %v371
        %2315 = vmatprep.subr.mxu0 0.0
        %2316 = vmatpush1.xpose.msra.mxu0 %v374
        %2317 = vmatprep.subr.mxu0 0.0
        %2318 = vmatpush1.xpose.msra.mxu0 %v377
        %2319 = vmatprep.subr.mxu0 0.0
        %2320 = vmatpush1.xpose.msra.mxu0 %v380
        %2321 = vmatprep.subr.mxu0 0.0
        %2322 = vmatpush1.xpose.msra.mxu0 %v383
        %2323 = vmatprep.subr.mxu0 0.0
        %2324 = vmatpush1.xpose.msra.mxu0 %v386
        %2325 = vmatprep.subr.mxu0 0.0
        %2326 = vmatpush1.xpose.msra.mxu0 %v389
        %2327 = vmatprep.subr.mxu0 0.0
        %2328 = vmatpush1.xpose.msra.mxu0 %v392
        %2329 = vmatprep.subr.mxu0 0.0
        %2330 = vmatpush1.xpose.msra.mxu0 %v395
        %2331 = vmatprep.subr.mxu0 0.0
        %2332 = vmatpush1.xpose.msra.mxu0 0.0
        %2333 = vmatprep.subr.mxu0 0.0
        %2334 = vmatpush1.xpose.msra.mxu0 0.0
        %2335 = vmatprep.subr.mxu0 0.0
        %2336 = vmatpush1.xpose.msra.mxu0 0.0
        %2337 = vmatprep.subr.mxu0 0.0
        %2338 = vmatpush1.xpose.msra.mxu0 0.0
        %2339 = vmatprep.subr.mxu0 0.0
        %2340 = vmatpush1.xpose.msra.mxu0 0.0
        %2341 = vmatprep.subr.mxu0 0.0
        %2342 = vmatpush1.xpose.msra.mxu0 0.0
        %2343 = vmatprep.subr.mxu0 0.0
        %2344 = vmatpush1.xpose.msra.mxu0 0.0
        %2345 = vmatprep.subr.mxu0 0.0
        %2346 = vmatpush1.xpose.msra.mxu0 0.0
        %2347 = vmatprep.subr.mxu0 0.0
        %2348 = vmatpush1.xpose.msra.mxu0 0.0
        %2349 = vmatprep.subr.mxu0 0.0
        %2350 = vmatpush1.xpose.msra.mxu0 0.0
        %2351 = vmatprep.subr.mxu0 0.0
        %2352 = vmatpush1.xpose.msra.mxu0 0.0
        %2353 = vmatprep.subr.mxu0 0.0
        %2354 = vmatpush1.xpose.msra.mxu0 0.0
        %2355 = vmatprep.subr.mxu0 0.0
        %2356 = vmatpush1.xpose.msra.mxu0 0.0
        %2357 = vmatprep.subr.mxu0 0.0
        %2358 = vmatpush1.xpose.msra.mxu0 0.0
        %2359 = vmatprep.subr.mxu0 0.0
        %2360 = vmatpush1.xpose.msra.mxu0 0.0
        %2361 = vmatprep.subr.mxu0 0.0
        %2362 = vmatpush1.xpose.msra.mxu0 0.0
        %2363 = vmatprep.mubr.f32.mxu0 0.0
        %2364 = vmatmul.mubr.f32.gmra.mrb[0].mxu0 %v2297
        %v2365 = vpop.f32.mrb[0].mxu0
        %v2366 = vadd.f32 0.0, %v2365
        %v2367 = vpop.f32.mrb[0].mxu0
        %2368 = vdwg.mxu0
        %v2369 = vmul.f32 %v2084, %v2084
        %v2370 = vsel %vm348, %v2369, 0.0
        %2371 = vadd.xlane.f32.xlu0 %v2370
        %v2372 = vpop.xlane.xlu0 %2371
        %v2373 = vmul.f32 %v2366, 2.0
        %v2374 = vlaneseq
        %v2375 = vshrl.u32 %v2374, 7
        %v2376 = vsub.s32 0, %v2375
        %v2377 = vrot.slane %v2293, %v2376
        %v2378 = vsub.f32 %v2377, %v2373
        %v2379 = vadd.f32 %v2378, %v2372
        %v2380 = vrot.slane %v2379, 4
        %v2381 = vmin.f32 %v2379, %v2380
        %v2382 = vrot.slane %v2381, 2
        %v2383 = vmin.f32 %v2381, %v2382
        %v2384 = vrot.slane %v2383, 1
        %v2385 = vmin.f32 %v2383, %v2384
        %v2386 = vmax.f32 %v2385, 0.0
        %v2387 = vadd.f32 %v2386, 1e-12
        %v2388 = vrsqrt.pop %v2387
        %v2389 = vmul.f32 %v2387, %v2388
        %vm2390 = vcmp.eq.f32.partialorder %v2387, inf
        %v2391 = vsel %vm2390, %v2387, %v2389
        %vm2392 = vcmp.eq.f32.partialorder %v2387, 0.0
        %v2393 = vand.u32 %v2387, 2147483648
        %v2394 = vsel %vm2392, %v2393, %v2391
        %v2395 = vsub.f32 0.0, %v2379
        %v2396 = vrot.slane %v2395, 4
        %v2397 = vmax.f32 %v2395, %v2396
        %v2398 = vrot.slane %v2397, 2
        %v2399 = vmax.f32 %v2397, %v2398
        %v2400 = vrot.slane %v2399, 1
        %v2401 = vmax.f32 %v2399, %v2400
        %v2402 = vsub.f32 %v2395, %v2401
        %v2403 = vmul.f32 %v2402, 1.442695
        %v2404 = vpow.pop %v2403
        %v2405 = vrot.slane %v2404, 4
        %v2406 = vadd.f32 %v2404, %v2405
        %v2407 = vrot.slane %v2406, 2
        %v2408 = vadd.f32 %v2406, %v2407
        %v2409 = vrot.slane %v2408, 1
        %v2410 = vadd.f32 %v2408, %v2409
        %v2411 = vrcp.pop %v2410
        %v2412 = vmul.f32 %v2404, %v2411
        %v2413 = vpack.c.bf16 %v342, %v342
        %v2414 = vpack.c.bf16 %v2154, %v2154
        %v2416 = vrot.slane %v2413, 2
        %2418 = vmatprep.subr.bf16.mxu0 0
        %2419 = vmatpush1.bf16.xpose.msra.mxu0 %v2414
        %2420 = vmatprep.subr.bf16.mxu0 0
        %2421 = vmatpush1.bf16.xpose.msra.mxu0 0
        %2422 = vmatprep.subr.bf16.mxu0 0
        %2423 = vmatpush1.bf16.xpose.msra.mxu0 0
        %2424 = vmatprep.subr.bf16.mxu0 0
        %2425 = vmatpush1.bf16.xpose.msra.mxu0 0
        %2426 = vmatprep.subr.bf16.mxu0 0
        %2427 = vmatpush1.bf16.xpose.msra.mxu0 0
        %2428 = vmatprep.subr.bf16.mxu0 0
        %2429 = vmatpush1.bf16.xpose.msra.mxu0 0
        %2430 = vmatprep.subr.bf16.mxu0 0
        %2431 = vmatpush1.bf16.xpose.msra.mxu0 0
        %2432 = vmatprep.subr.bf16.mxu0 0
        %2433 = vmatpush1.bf16.xpose.msra.mxu0 0
        %2434 = vmatprep.subr.bf16.mxu0 0
        %2435 = vmatpush1.bf16.xpose.msra.mxu0 0
        %2436 = vmatprep.subr.bf16.mxu0 0
        %2437 = vmatpush1.bf16.xpose.msra.mxu0 0
        %2438 = vmatprep.subr.bf16.mxu0 0
        %2439 = vmatpush1.bf16.xpose.msra.mxu0 0
        %2440 = vmatprep.subr.bf16.mxu0 0
        %2441 = vmatpush1.bf16.xpose.msra.mxu0 0
        %2442 = vmatprep.subr.bf16.mxu0 0
        %2443 = vmatpush1.bf16.xpose.msra.mxu0 0
        %2444 = vmatprep.subr.bf16.mxu0 0
        %2445 = vmatpush1.bf16.xpose.msra.mxu0 0
        %2446 = vmatprep.subr.bf16.mxu0 0
        %2447 = vmatpush1.bf16.xpose.msra.mxu0 0
        %2448 = vmatprep.subr.bf16.mxu0 0
        %2449 = vmatpush1.bf16.xpose.msra.mxu0 0
        %2450 = vmatprep.mubr.bf16.mxu0 0
        %2451 = vmatmul.mubr.bf16.gmra.mrb[0].mxu0 %v2416
        %v2452 = vpop.f32.mrb[0].mxu0
        %v2453 = vadd.f32 0.0, %v2452
        %v2454 = vpop.f32.mrb[0].mxu0
        %v2455 = vpop.f32.mrb[0].mxu0
        %v2456 = vpop.f32.mrb[0].mxu0
        %2457 = vdwg.mxu0
        %v2459 = vsel %vm1753, %v2453, 0
        %2461 = vmatprep.subr.mxu0 0.0
        %2462 = vmatpush1.msra.mxu0 %v2412
        %2463 = vmatprep.subr.mxu0 0.0
        %2464 = vmatpush1.msra.mxu0 0.0
        %2465 = vmatprep.subr.mxu0 0.0
        %2466 = vmatpush1.msra.mxu0 0.0
        %2467 = vmatprep.subr.mxu0 0.0
        %2468 = vmatpush1.msra.mxu0 0.0
        %2469 = vmatprep.subr.mxu0 0.0
        %2470 = vmatpush1.msra.mxu0 0.0
        %2471 = vmatprep.subr.mxu0 0.0
        %2472 = vmatpush1.msra.mxu0 0.0
        %2473 = vmatprep.subr.mxu0 0.0
        %2474 = vmatpush1.msra.mxu0 0.0
        %2475 = vmatprep.subr.mxu0 0.0
        %2476 = vmatpush1.msra.mxu0 0.0
        %2477 = vmatprep.subr.mxu0 0.0
        %2478 = vmatpush1.msra.mxu0 0.0
        %2479 = vmatprep.subr.mxu0 0.0
        %2480 = vmatpush1.msra.mxu0 0.0
        %2481 = vmatprep.subr.mxu0 0.0
        %2482 = vmatpush1.msra.mxu0 0.0
        %2483 = vmatprep.subr.mxu0 0.0
        %2484 = vmatpush1.msra.mxu0 0.0
        %2485 = vmatprep.subr.mxu0 0.0
        %2486 = vmatpush1.msra.mxu0 0.0
        %2487 = vmatprep.subr.mxu0 0.0
        %2488 = vmatpush1.msra.mxu0 0.0
        %2489 = vmatprep.subr.mxu0 0.0
        %2490 = vmatpush1.msra.mxu0 0.0
        %2491 = vmatprep.subr.mxu0 0.0
        %2492 = vmatpush1.msra.mxu0 0.0
        %2493 = vmatprep.subr.mxu0 0.0
        %2494 = vmatpush1.msra.mxu0 0.0
        %2495 = vmatprep.subr.mxu0 0.0
        %2496 = vmatpush1.msra.mxu0 0.0
        %2497 = vmatprep.subr.mxu0 0.0
        %2498 = vmatpush1.msra.mxu0 0.0
        %2499 = vmatprep.subr.mxu0 0.0
        %2500 = vmatpush1.msra.mxu0 0.0
        %2501 = vmatprep.subr.mxu0 0.0
        %2502 = vmatpush1.msra.mxu0 0.0
        %2503 = vmatprep.subr.mxu0 0.0
        %2504 = vmatpush1.msra.mxu0 0.0
        %2505 = vmatprep.subr.mxu0 0.0
        %2506 = vmatpush1.msra.mxu0 0.0
        %2507 = vmatprep.subr.mxu0 0.0
        %2508 = vmatpush1.msra.mxu0 0.0
        %2509 = vmatprep.subr.mxu0 0.0
        %2510 = vmatpush1.msra.mxu0 0.0
        %2511 = vmatprep.subr.mxu0 0.0
        %2512 = vmatpush1.msra.mxu0 0.0
        %2513 = vmatprep.subr.mxu0 0.0
        %2514 = vmatpush1.msra.mxu0 0.0
        %2515 = vmatprep.subr.mxu0 0.0
        %2516 = vmatpush1.msra.mxu0 0.0
        %2517 = vmatprep.subr.mxu0 0.0
        %2518 = vmatpush1.msra.mxu0 0.0
        %2519 = vmatprep.subr.mxu0 0.0
        %2520 = vmatpush1.msra.mxu0 0.0
        %2521 = vmatprep.subr.mxu0 0.0
        %2522 = vmatpush1.msra.mxu0 0.0
        %2523 = vmatprep.subr.mxu0 0.0
        %2524 = vmatpush1.msra.mxu0 0.0
        %2525 = vmatprep.mubr.f32.mxu0 0.0
        %2526 = vmatmul.mubr.f32.gmra.mrb[0].mxu0 %v2459
        %v2527 = vpop.f32.mrb[0].mxu0
        %v2528 = vadd.f32 0.0, %v2527
        %v2529 = vpop.f32.mrb[0].mxu0
        %2530 = vdwg.mxu0
        %2531 = vset.pattern.permute.xlu0 3
        %2532 = vperm.xlu0 %2531, %v342
        %v2533 = vpop.permute.xlu0 %2532
        %v2535 = vshrl.u32 %v2413, 16
        %v2537 = vrot.slane %v2535, 2
        %v2539 = vrot.slane %v2533, 6
        %2541 = vmatprep.subr.bf16.mxu0 0
        %2542 = vmatpush1.bf16.xpose.msra.mxu0 %v863
        %2543 = vmatprep.subr.bf16.mxu0 0
        %2544 = vmatpush1.bf16.xpose.msra.mxu0 %v864
        %2545 = vmatprep.subr.bf16.mxu0 0
        %2546 = vmatpush1.bf16.xpose.msra.mxu0 %v865
        %2547 = vmatprep.subr.bf16.mxu0 0
        %2548 = vmatpush1.bf16.xpose.msra.mxu0 %v866
        %2549 = vmatprep.subr.bf16.mxu0 0
        %2550 = vmatpush1.bf16.xpose.msra.mxu0 %v867
        %2551 = vmatprep.subr.bf16.mxu0 0
        %2552 = vmatpush1.bf16.xpose.msra.mxu0 %v868
        %2553 = vmatprep.subr.bf16.mxu0 0
        %2554 = vmatpush1.bf16.xpose.msra.mxu0 %v869
        %2555 = vmatprep.subr.bf16.mxu0 0
        %2556 = vmatpush1.bf16.xpose.msra.mxu0 %v870
        %2557 = vmatprep.subr.bf16.mxu0 0
        %2558 = vmatpush1.bf16.xpose.msra.mxu0 0
        %2559 = vmatprep.subr.bf16.mxu0 0
        %2560 = vmatpush1.bf16.xpose.msra.mxu0 0
        %2561 = vmatprep.subr.bf16.mxu0 0
        %2562 = vmatpush1.bf16.xpose.msra.mxu0 0
        %2563 = vmatprep.subr.bf16.mxu0 0
        %2564 = vmatpush1.bf16.xpose.msra.mxu0 0
        %2565 = vmatprep.subr.bf16.mxu0 0
        %2566 = vmatpush1.bf16.xpose.msra.mxu0 0
        %2567 = vmatprep.subr.bf16.mxu0 0
        %2568 = vmatpush1.bf16.xpose.msra.mxu0 0
        %2569 = vmatprep.subr.bf16.mxu0 0
        %2570 = vmatpush1.bf16.xpose.msra.mxu0 0
        %2571 = vmatprep.subr.bf16.mxu0 0
        %2572 = vmatpush1.bf16.xpose.msra.mxu0 0
        %2573 = vmatprep.mubr.bf16.mxu0 0
        %2574 = vmatmul.mubr.bf16.gmra.mrb[0].mxu0 %v2537
        %v2575 = vpop.f32.mrb[0].mxu0
        %v2576 = vadd.f32 %v2539, %v2575
        %v2577 = vpop.f32.mrb[0].mxu0
        %v2578 = vpop.f32.mrb[0].mxu0
        %v2579 = vpop.f32.mrb[0].mxu0
        %2580 = vdwg.mxu0
        %v2581 = vrot.slane %v2535, 1
        %2583 = vmatprep.subr.bf16.mxu0 0
        %2584 = vmatpush1.bf16.xpose.msra.mxu0 %v690
        %2585 = vmatprep.subr.bf16.mxu0 0
        %2586 = vmatpush1.bf16.xpose.msra.mxu0 %v691
        %2587 = vmatprep.subr.bf16.mxu0 0
        %2588 = vmatpush1.bf16.xpose.msra.mxu0 %v692
        %2589 = vmatprep.subr.bf16.mxu0 0
        %2590 = vmatpush1.bf16.xpose.msra.mxu0 %v693
        %2591 = vmatprep.subr.bf16.mxu0 0
        %2592 = vmatpush1.bf16.xpose.msra.mxu0 %v694
        %2593 = vmatprep.subr.bf16.mxu0 0
        %2594 = vmatpush1.bf16.xpose.msra.mxu0 %v695
        %2595 = vmatprep.subr.bf16.mxu0 0
        %2596 = vmatpush1.bf16.xpose.msra.mxu0 %v696
        %2597 = vmatprep.subr.bf16.mxu0 0
        %2598 = vmatpush1.bf16.xpose.msra.mxu0 %v697
        %2599 = vmatprep.subr.bf16.mxu0 0
        %2600 = vmatpush1.bf16.xpose.msra.mxu0 0
        %2601 = vmatprep.subr.bf16.mxu0 0
        %2602 = vmatpush1.bf16.xpose.msra.mxu0 0
        %2603 = vmatprep.subr.bf16.mxu0 0
        %2604 = vmatpush1.bf16.xpose.msra.mxu0 0
        %2605 = vmatprep.subr.bf16.mxu0 0
        %2606 = vmatpush1.bf16.xpose.msra.mxu0 0
        %2607 = vmatprep.subr.bf16.mxu0 0
        %2608 = vmatpush1.bf16.xpose.msra.mxu0 0
        %2609 = vmatprep.subr.bf16.mxu0 0
        %2610 = vmatpush1.bf16.xpose.msra.mxu0 0
        %2611 = vmatprep.subr.bf16.mxu0 0
        %2612 = vmatpush1.bf16.xpose.msra.mxu0 0
        %2613 = vmatprep.subr.bf16.mxu0 0
        %2614 = vmatpush1.bf16.xpose.msra.mxu0 0
        %2615 = vmatprep.mubr.bf16.mxu0 0
        %2616 = vmatmul.mubr.bf16.gmra.mrb[0].mxu0 %v2581
        %v2617 = vpop.f32.mrb[0].mxu0
        %v2618 = vadd.f32 %v2528, %v2617
        %v2619 = vpop.f32.mrb[0].mxu0
        %v2620 = vpop.f32.mrb[0].mxu0
        %v2621 = vpop.f32.mrb[0].mxu0
        %2622 = vdwg.mxu0
        %2623 = vset.pattern.permute.xlu0 0
        %2624 = vperm.xlu0 %2623, %v342
        %v2625 = vpop.permute.xlu0 %2624
        %v2626 = vrot.slane %v2625, 7
        %v2628 = vmul.f32 %v2576, %v2626
        %v2629 = vadd.f32 %v2618, %v2628
        %2630 = vset.pattern.permute.xlu0 1
        %2631 = vperm.xlu0 %2630, %v342
        %v2632 = vpop.permute.xlu0 %2631
        %v2634 = vmul.f32 %v2394, %v2632
        %v2636 = vrot.slane %v2634, 7
        %v2638 = vadd.f32 %v2629, %v2636
        %2639 = vset.pattern.permute.xlu0 2
        %2640 = vperm.xlu0 %2639, %v342
        %v2641 = vpop.permute.xlu0 %2640
        %v2642 = vrot.slane %v2641, 7
        %v2644 = vadd.f32 %v2638, %v2642
        %2645 = vst [vmem:[%s270] sm:$0x1] %v2644
        %s2646 = sand.u32 %s181, 1
        %s2647 = scalar_lea.sflag [#allocation3], %s2646
        %s2648 = sand.u32 %s181, 1
        %s2649 = scalar_lea.vmem [#allocation2], %s2648
        // Predicated region
        $region49: #{tpu_custom_call.1} parent=47 // pred_check
          %p2650 = pneg %p191
        $region50: #{tpu_custom_call.1} parent=47 // pred_check_branch
          %2652 = sbr.rel (%p2650) target = $region52
        $region51: #{tpu_custom_call.1} parent=47 // pred_region
          %s2654 = ssub.s32 16, 16
          %2655 = vsyncadd %s2647, %s2654
          %s2656 = smul.addr %s21, 16
          %s2657 = scalar_lea.hbm %s7, %s2656
          %s2659 = sshll.u32 %s2649, 4
          %s2660 = int_to_ptr.vmem [resolvable:$true] %s2659
          %2662 = dma.vmem_to_hbm [thread:$0]  %s2660, 16, %s2657, %s2647
        $region52: #{tpu_custom_call.1} parent=47 // pred_fallthru
          _
      $region48: #{tpu_custom_call.1} parent=5 // pred_fallthru
        _
      %p2663 = scmp.le.s32.totalorder 2, %s16
      // Predicated region
      $region53: #{tpu_custom_call.1} parent=5 // pred_check
        %p2664 = pneg %p2663
      $region54: #{tpu_custom_call.1} parent=5 // pred_check_branch
        %2666 = sbr.rel (%p2664) target = $region56
      $region55: #{tpu_custom_call.1} parent=5 // pred_region
        %s2667 = ssub.s32 %s16, 2
        // Predicated region
        $region57: #{tpu_custom_call.1} parent=55 // pred_check
          %p2668 = pneg %p197
        $region58: #{tpu_custom_call.1} parent=55 // pred_check_branch
          %2670 = sbr.rel (%p2668) target = $region60
        $region59: #{tpu_custom_call.1} parent=55 // pred_region
          %s2671 = sand.u32 %s182, 1
          %s2672 = scalar_lea.sflag [#allocation3], %s2671
          %s2673 = sand.u32 %s182, 1
          %s2674 = scalar_lea.vmem [#allocation2], %s2673
          %2675 = dma.done %s2672, 16
        $region60: #{tpu_custom_call.1} parent=55 // pred_fallthru
          _
      $region56: #{tpu_custom_call.1} parent=5 // pred_fallthru
        _
    $region6: #{tpu_custom_call.1} parent=1 // loop_footer
      %s20 = sadd.s32 1, %s16
    $region7: #{tpu_custom_call.1} parent=1 // loop_footer_branch
      %15 = sbr.rel target = $region3
    $region8: #{tpu_custom_call.1} parent=1 // loop_exit
      _
    %2676 = vsyncpa [#allocation3], 1
    %s2677 = scalar_lea.sflag [#allocation3], 1
    %2678 = vsyncpa %s2677, 1

</llo_original>
